<compile_context>
chip_gen: v5e
topology: v5e:2x2
jax: 0.10.0
libtpu: 0.0.40
codegen_flags: <defaults>
</compile_context>

<pallas_src>
import functools

import jax
import jax.numpy as jnp
from jax.experimental import pallas as pl
from jax.experimental.pallas import tpu as pltpu

_MXU_DTYPE = jnp.bfloat16  # dtype of the 1x1 / 3x3 conv matmul operands


# ----------------------------------------------------------------------------
# Fused Bottleneck kernel (one batch element per grid step, everything in VMEM)
# ----------------------------------------------------------------------------
def _bottleneck_kernel(x_ref, w1_ref, w2_ref, w3_ref,
                       s1_ref, b1_ref, s2_ref, b2_ref, s3_ref, b3_ref,
                       khw_ref, kcw_ref, khc_ref, gb_ref, o_ref, *, H, W):
    mxu = w1_ref.dtype
    x = x_ref[...]                                         # (H*W, Cin) f32
    cmid = w1_ref.shape[1]
    cout = w3_ref.shape[1]

    # --- conv1 (1x1) + BN + ReLU:  one MXU matmul ---------------------------
    h1 = jnp.dot(x.astype(mxu), w1_ref[...], preferred_element_type=jnp.float32)
    h1 = jnp.maximum(h1 * s1_ref[...] + b1_ref[...], 0.0)  # (HW, Cmid)

    # --- conv2 (3x3, stride 1, pad 1): im2col + one MXU matmul --------------
    h1_3d = h1.reshape(H, W, cmid)                         # layout-preserving (W == 8)
    zr = jnp.zeros((1, W, cmid), jnp.float32)
    zc = jnp.zeros((H + 2, 1, cmid), jnp.float32)
    hp = jnp.concatenate([zr, h1_3d, zr], axis=0)          # (H+2, W,   Cmid)
    hp = jnp.concatenate([zc, hp, zc], axis=1)             # (H+2, W+2, Cmid)
    patches = [hp[kh:kh + H, kw:kw + W, :].reshape(H * W, cmid)
               for kh in range(3) for kw in range(3)]
    im2col = jnp.concatenate(patches, axis=1).astype(mxu)  # (HW, 9*Cmid)
    h2 = jnp.dot(im2col, w2_ref[...], preferred_element_type=jnp.float32)
    h2 = jnp.maximum(h2 * s2_ref[...] + b2_ref[...], 0.0)  # (HW, Cmid)

    # --- conv3 (1x1) + BN ----------------------------------------------------
    y = jnp.dot(h2.astype(mxu), w3_ref[...], preferred_element_type=jnp.float32)
    y = y * s3_ref[...] + b3_ref[...]                      # (HW, Cout)
    y3 = y.reshape(H, W, cout)                             # layout-preserving

    # --- triplet attention: Z-pool -> 7x7 conv (one band matmul) -> sigmoid --
    # out[i, j] = sum_{ch,r,q} w[ch,r,q] * pool_ch[i+r-3, j+q-3]  (zero padded)
    # Row offset r handled by 7 row slices of a row-padded plane; column offset
    # q and column padding are folded into the precomputed band matrix K, so the
    # whole 7x7/2-channel conv is a single (A, 14*B) @ (14*B, B) matmul.
    def gate(pmax, pmean, kmat, gbias):
        a, b = pmax.shape
        z3 = jnp.zeros((3, b), jnp.float32)
        pm = jnp.concatenate([z3, pmax, z3], axis=0)       # (a+6, b)  ch0 = max
        pe = jnp.concatenate([z3, pmean, z3], axis=0)      # (a+6, b)  ch1 = mean
        cols = []
        for r in range(7):                                 # block order k = r*2 + ch
            cols.append(pm[r:r + a, :])
            cols.append(pe[r:r + a, :])
        xg = jnp.concatenate(cols, axis=1)                 # (a, 14*b)
        conv = jnp.dot(xg, kmat, preferred_element_type=jnp.float32)
        return 1.0 / (1.0 + jnp.exp(-(conv + gbias)))      # gate-BN scale folded in kmat

    s_hw = gate(jnp.max(y3, axis=2), jnp.mean(y3, axis=2), khw_ref[...], gb_ref[0])  # (H, W)
    s_cw = gate(jnp.max(y3, axis=0), jnp.mean(y3, axis=0), kcw_ref[...], gb_ref[1])  # (W, C)
    s_hc = gate(jnp.max(y3, axis=1), jnp.mean(y3, axis=1), khc_ref[...], gb_ref[2])  # (H, C)

    ta = (y3 * s_hw[:, :, None] + y3 * s_cw[None, :, :] + y3 * s_hc[:, None, :]) * (1.0 / 3.0)

    # residual add (identity = x, since stride=1 / downsample=None) + final ReLU
    out = jnp.maximum(ta.reshape(H * W, cout) + x, 0.0)
    o_ref[...] = out.astype(o_ref.dtype)


# ----------------------------------------------------------------------------
# Wrapper: one pallas_call for the whole Bottleneck
# ----------------------------------------------------------------------------
def bottleneck_forward(x_nhwc, params):
    n, h, w, cin = x_nhwc.shape
    cmid = params["w1"].shape[1]
    cout = params["w3"].shape[1]
    if cin != cout:
        # TODO(synk): stride>1 / downsample branch not implemented.
        raise NotImplementedError("residual path requires Cin == Cout*expansion")

    hw = h * w
    x2d = x_nhwc.reshape(n * hw, cin)                      # metadata-only reshape

    kernel = functools.partial(_bottleneck_kernel, H=h, W=w)
    inv = lambda i: (0, 0)                                 # grid-invariant weights
    out2d = pl.pallas_call(
        kernel,
        out_shape=jax.ShapeDtypeStruct((n * hw, cout), jnp.float32),
        grid=(n,),
        in_specs=[
            pl.BlockSpec((hw, cin), lambda i: (i, 0)),             # x (per-image slab)
            pl.BlockSpec((cin, cmid), inv),                        # w1
            pl.BlockSpec((9 * cmid, cmid), inv),                   # w2 (im2col layout)
            pl.BlockSpec((cmid, cout), inv),                       # w3
            pl.BlockSpec((1, cmid), inv),                          # s1
            pl.BlockSpec((1, cmid), inv),                          # b1
            pl.BlockSpec((1, cmid), inv),                          # s2
            pl.BlockSpec((1, cmid), inv),                          # b2
            pl.BlockSpec((1, cout), inv),                          # s3
            pl.BlockSpec((1, cout), inv),                          # b3
            pl.BlockSpec((14 * w, w), inv),                        # gate band K (H,W)
            pl.BlockSpec((14 * cout, cout), inv),                  # gate band K (C,W)
            pl.BlockSpec((14 * cout, cout), inv),                  # gate band K (H,C)
            pl.BlockSpec(memory_space=pltpu.MemorySpace.SMEM),     # 3 gate-BN biases
        ],
        out_specs=pl.BlockSpec((hw, cout), lambda i: (i, 0)),
        compiler_params=pltpu.CompilerParams(
            dimension_semantics=("parallel",)),                    # v7x: 2 TCs share batch
    )(x2d, params["w1"], params["w2col"], params["w3"],
      params["s1"], params["b1"], params["s2"], params["b2"],
      params["s3"], params["b3"],
      params["k_hw"], params["k_cw"], params["k_hc"], params["gate_bias"])
    return out2d.reshape(n, h, w, cout)


# ----------------------------------------------------------------------------
# Parameter preparation
# ----------------------------------------------------------------------------
def _gate_band_matrix(w_eff, b, scale):
    """Band matrix K (14*b, b) so the 7x7/2-channel gate conv is one matmul.

    w_eff[ch, r, q]: r indexes the row (sublane) offset, q the column offset.
    K block (r, ch) satisfies K[m, j] = w_eff[ch, r, m - j + 3] inside the band,
    0 outside (this also implements the zero padding along the column axis).
    The gate-BN scale is folded in.
    """
    m = jnp.arange(b)[:, None]
    j = jnp.arange(b)[None, :]
    q = m - j + 3
    valid = (q >= 0) & (q <= 6)
    qc = jnp.clip(q, 0, 6)
    k = jnp.where(valid[None, None, :, :], w_eff[:, :, qc], 0.0)   # (2, 7, b, b)
    k = jnp.transpose(k, (1, 0, 2, 3)).reshape(14 * b, b)          # block order r*2+ch
    return (k * scale).astype(jnp.float32)


def init_params(key, cin, cmid, cout, width):
    ks = jax.random.split(key, 12)
    w1_oi = 0.1 * jax.random.normal(ks[0], (cmid, cin), jnp.float32)           # conv1 (Co,Ci)
    w2_oihw = 0.1 * jax.random.normal(ks[1], (cmid, cmid, 3, 3), jnp.float32)  # conv2 (Co,Ci,3,3)
    w3_oi = 0.1 * jax.random.normal(ks[2], (cout, cmid), jnp.float32)          # conv3 (Co,Ci)
    g_hw = 0.1 * jax.random.normal(ks[3], (2, 7, 7), jnp.float32)              # gate conv (1,2,7,7)
    g_cw = 0.1 * jax.random.normal(ks[4], (2, 7, 7), jnp.float32)
    g_hc = 0.1 * jax.random.normal(ks[5], (2, 7, 7), jnp.float32)

    def bn_fold(k, c):
        k1, k2, k3, k4 = jax.random.split(k, 4)
        gamma = 1.0 + 0.1 * jax.random.normal(k1, (c,), jnp.float32)
        beta = 0.1 * jax.random.normal(k2, (c,), jnp.float32)
        mean = 0.1 * jax.random.normal(k3, (c,), jnp.float32)
        var = 0.5 + jnp.abs(jax.random.normal(k4, (c,), jnp.float32))
        scale = gamma * jax.lax.rsqrt(var + 1e-5)
        bias = beta - mean * scale
        return scale, bias

    s1, b1 = bn_fold(ks[6], cmid)
    s2, b2 = bn_fold(ks[7], cmid)
    s3, b3 = bn_fold(ks[8], cout)
    shw, bhw = bn_fold(ks[9], 1)
    scw, bcw = bn_fold(ks[10], 1)
    shc, bhc = bn_fold(ks[11], 1)

    params = dict(
        # conv weights in matmul layout (bf16 MXU inputs, f32 accumulate)
        w1=w1_oi.T.astype(_MXU_DTYPE),                                          # (Cin, Cmid)
        w2col=jnp.transpose(w2_oihw, (2, 3, 1, 0)).reshape(9 * cmid, cmid)      # (9*Cmid, Cmid)
                 .astype(_MXU_DTYPE),
        w3=w3_oi.T.astype(_MXU_DTYPE),                                          # (Cmid, Cout)
        # folded BN as (1, C) rows
        s1=s1.reshape(1, cmid), b1=b1.reshape(1, cmid),
        s2=s2.reshape(1, cmid), b2=b2.reshape(1, cmid),
        s3=s3.reshape(1, cout), b3=b3.reshape(1, cout),
        # triplet-attention gate convs as band matrices (gate-BN scale folded in)
        k_hw=_gate_band_matrix(g_hw, width, shw[0]),                            # plane (H, W)
        k_cw=_gate_band_matrix(jnp.transpose(g_cw, (0, 2, 1)), cout, scw[0]),   # plane (W, C)
        k_hc=_gate_band_matrix(g_hc, cout, shc[0]),                             # plane (H, C)
        gate_bias=jnp.array([bhw[0], bcw[0], bhc[0]], jnp.float32),
        # raw parameters for the pure-JAX reference
        _raw=dict(w1=w1_oi, w2=w2_oihw, w3=w3_oi,
                  g_hw=g_hw, g_cw=g_cw, g_hc=g_hc,
                  s1=s1, b1=b1, s2=s2, b2=b2, s3=s3, b3=b3,
                  shw=shw[0], bhw=bhw[0], scw=scw[0], bcw=bcw[0],
                  shc=shc[0], bhc=bhc[0]),
    )
    return params


# ----------------------------------------------------------------------------
# Pure-JAX NCHW reference that mirrors the PyTorch module structure
# ----------------------------------------------------------------------------
def reference_forward_nchw(x, rp):
    n, cin, h, w = x.shape
    relu = lambda t: jnp.maximum(t, 0.0)
    bn = lambda t, s, b: t * s[None, :, None, None] + b[None, :, None, None]
    conv1x1 = lambda t, wgt: jnp.einsum('nchw,dc->ndhw', t, wgt)

    identity = x
    out = relu(bn(conv1x1(x, rp["w1"]), rp["s1"], rp["b1"]))
    xp = jnp.pad(out, ((0, 0), (0, 0), (1, 1), (1, 1)))
    cmid = rp["w2"].shape[0]
    o2 = jnp.zeros((n, cmid, h, w), jnp.float32)
    for kh in range(3):
        for kw in range(3):
            o2 = o2 + jnp.einsum('nchw,dc->ndhw',
                                 xp[:, :, kh:kh + h, kw:kw + w],
                                 rp["w2"][:, :, kh, kw])
    out = relu(bn(o2, rp["s2"], rp["b2"]))
    out = bn(conv1x1(out, rp["w3"]), rp["s3"], rp["b3"])

    def zpool(t):  # over dim 1
        return jnp.stack([jnp.max(t, axis=1), jnp.mean(t, axis=1)], axis=1)

    def attention_gate(t, wgt, s, b):
        d0, d1 = t.shape[2], t.shape[3]
        z = zpool(t)
        zp = jnp.pad(z, ((0, 0), (0, 0), (3, 3), (3, 3)))
        conv = jnp.zeros((n, d0, d1), jnp.float32)
        for ch in range(2):
            for dh in range(7):
                for dw in range(7):
                    conv = conv + wgt[ch, dh, dw] * zp[:, ch, dh:dh + d0, dw:dw + d1]
        scale = jax.nn.sigmoid(conv * s + b)[:, None, :, :]
        return t * scale

    x1 = jnp.transpose(out, (0, 2, 1, 3))
    x1 = attention_gate(x1, rp["g_cw"], rp["scw"], rp["bcw"])
    x1 = jnp.transpose(x1, (0, 2, 1, 3))
    x2 = jnp.transpose(out, (0, 3, 2, 1))
    x2 = attention_gate(x2, rp["g_hc"], rp["shc"], rp["bhc"])
    x2 = jnp.transpose(x2, (0, 3, 2, 1))
    x3 = attention_gate(out, rp["g_hw"], rp["shw"], rp["bhw"])
    ta = (x1 + x2 + x3) / 3.0
    return relu(ta + identity)


if __name__ == "__main__":
    N, H, W = 2, 8, 8
    cmid = 8                 # out_channel
    cout = cmid * 4          # expansion = 4
    cin = cout               # required for the residual add (downsample=None)

    key = jax.random.PRNGKey(0)
    kx, kp = jax.random.split(key)
    x_nhwc = jax.random.normal(kx, (N, H, W, cin), jnp.float32)
    params = init_params(kp, cin, cmid, cout, W)

    out = jax.block_until_ready(bottleneck_forward(x_nhwc, params))

    # Check against a pure-JAX NCHW reference mirroring the PyTorch code.
    # (atol/rtol 1e-2: the conv matmuls use bf16 MXU inputs with f32 accumulate.)
    x_nchw = jnp.transpose(x_nhwc, (0, 3, 1, 2))
    ref_nchw = reference_forward_nchw(x_nchw, params["_raw"])
    ref_nhwc = jnp.transpose(ref_nchw, (0, 2, 3, 1))
    max_err = float(jnp.max(jnp.abs(out - ref_nhwc)))
    assert jnp.allclose(out, ref_nhwc, atol=1e-2, rtol=1e-2), max_err

    print("KERNEL_OK")
</pallas_src>

<mosaic_0001>
module attributes {stable_mosaic.version = 11 : i64} {
  func.func @_bottleneck_kernel(%arg0: i32, %arg1: memref<64x32xf32, #tpu.memory_space<vmem>>, %arg2: memref<32x8xbf16, #tpu.memory_space<vmem>>, %arg3: memref<72x8xbf16, #tpu.memory_space<vmem>>, %arg4: memref<8x32xbf16, #tpu.memory_space<vmem>>, %arg5: memref<1x8xf32, #tpu.memory_space<vmem>>, %arg6: memref<1x8xf32, #tpu.memory_space<vmem>>, %arg7: memref<1x8xf32, #tpu.memory_space<vmem>>, %arg8: memref<1x8xf32, #tpu.memory_space<vmem>>, %arg9: memref<1x32xf32, #tpu.memory_space<vmem>>, %arg10: memref<1x32xf32, #tpu.memory_space<vmem>>, %arg11: memref<112x8xf32, #tpu.memory_space<vmem>>, %arg12: memref<448x32xf32, #tpu.memory_space<vmem>>, %arg13: memref<448x32xf32, #tpu.memory_space<vmem>>, %arg14: memref<3xf32, #tpu.memory_space<smem>>, %arg15: memref<64x32xf32, #tpu.memory_space<vmem>>) attributes {dimension_semantics = [#tpu.dimension_semantics<parallel>], iteration_bounds = array<i64: 2>, scalar_prefetch = 0 : i64, scratch_operands = 0 : i64, tpu.core_type = #tpu.core_type<tc>, window_params = [{transform_indices = @transform_0, window_bounds = array<i64: 64, 32>}, {pipeline_mode = #tpu.pipeline_mode<synchronous>, transform_indices = @transform_1, window_bounds = array<i64: 32, 8>}, {pipeline_mode = #tpu.pipeline_mode<synchronous>, transform_indices = @transform_2, window_bounds = array<i64: 72, 8>}, {pipeline_mode = #tpu.pipeline_mode<synchronous>, transform_indices = @transform_3, window_bounds = array<i64: 8, 32>}, {pipeline_mode = #tpu.pipeline_mode<synchronous>, transform_indices = @transform_4, window_bounds = array<i64: 1, 8>}, {pipeline_mode = #tpu.pipeline_mode<synchronous>, transform_indices = @transform_5, window_bounds = array<i64: 1, 8>}, {pipeline_mode = #tpu.pipeline_mode<synchronous>, transform_indices = @transform_6, window_bounds = array<i64: 1, 8>}, {pipeline_mode = #tpu.pipeline_mode<synchronous>, transform_indices = @transform_7, window_bounds = array<i64: 1, 8>}, {pipeline_mode = #tpu.pipeline_mode<synchronous>, transform_indices = @transform_8, window_bounds = array<i64: 1, 32>}, {pipeline_mode = #tpu.pipeline_mode<synchronous>, transform_indices = @transform_9, window_bounds = array<i64: 1, 32>}, {pipeline_mode = #tpu.pipeline_mode<synchronous>, transform_indices = @transform_10, window_bounds = array<i64: 112, 8>}, {pipeline_mode = #tpu.pipeline_mode<synchronous>, transform_indices = @transform_11, window_bounds = array<i64: 448, 32>}, {pipeline_mode = #tpu.pipeline_mode<synchronous>, transform_indices = @transform_12, window_bounds = array<i64: 448, 32>}, {transform_indices = @transform_13, window_bounds = array<i64: 3>}, {transform_indices = @transform_14, window_bounds = array<i64: 64, 32>}]} {
    %c0 = arith.constant 0 : index
    %c0_0 = arith.constant 0 : index
    %0 = vector.load %arg1[%c0, %c0_0] : memref<64x32xf32, #tpu.memory_space<vmem>>, vector<64x32xf32>
    %1 = arith.truncf %0 : vector<64x32xf32> to vector<64x32xbf16>
    %c0_1 = arith.constant 0 : index
    %c0_2 = arith.constant 0 : index
    %2 = vector.load %arg2[%c0_1, %c0_2] : memref<32x8xbf16, #tpu.memory_space<vmem>>, vector<32x8xbf16>
    %cst = arith.constant dense<0.000000e+00> : vector<64x8xf32>
    %3 = tpu.matmul %1, %2, %cst {dimension_numbers = #tpu.dot_dimension_numbers<[1], [0], [0], [1], [0, 0, 1, 1], [], []>} : vector<64x32xbf16>, vector<32x8xbf16>, vector<64x8xf32> -> vector<64x8xf32>
    %c0_3 = arith.constant 0 : index
    %c0_4 = arith.constant 0 : index
    %4 = vector.load %arg5[%c0_3, %c0_4] : memref<1x8xf32, #tpu.memory_space<vmem>>, vector<1x8xf32>
    %5 = vector.broadcast %4 : vector<1x8xf32> to vector<64x8xf32>
    %6 = arith.mulf %3, %5 : vector<64x8xf32>
    %c0_5 = arith.constant 0 : index
    %c0_6 = arith.constant 0 : index
    %7 = vector.load %arg6[%c0_5, %c0_6] : memref<1x8xf32, #tpu.memory_space<vmem>>, vector<1x8xf32>
    %8 = vector.broadcast %7 : vector<1x8xf32> to vector<64x8xf32>
    %9 = arith.addf %6, %8 : vector<64x8xf32>
    %cst_7 = arith.constant 0.000000e+00 : f32
    %10 = vector.broadcast %cst_7 : f32 to vector<64x8xf32>
    %11 = arith.maximumf %9, %10 : vector<64x8xf32>
    %12 = vector.shape_cast %11 : vector<64x8xf32> to vector<8x8x8xf32>
    %cst_8 = arith.constant 0.000000e+00 : f32
    %13 = vector.broadcast %cst_8 : f32 to vector<1x8x8xf32>
    %cst_9 = arith.constant 0.000000e+00 : f32
    %14 = vector.broadcast %cst_9 : f32 to vector<10x1x8xf32>
    %15 = tpu.concatenate %13, %12, %13 in 0 : vector<1x8x8xf32>, vector<8x8x8xf32>, vector<1x8x8xf32> -> vector<10x8x8xf32>
    %16 = tpu.concatenate %14, %15, %14 in 1 : vector<10x1x8xf32>, vector<10x8x8xf32>, vector<10x1x8xf32> -> vector<10x10x8xf32>
    %17 = vector.extract_strided_slice %16 {offsets = [0, 0, 0], sizes = [8, 8, 8], strides = [1, 1, 1]} : vector<10x10x8xf32> to vector<8x8x8xf32>
    %18 = vector.shape_cast %17 : vector<8x8x8xf32> to vector<64x8xf32>
    %19 = vector.extract_strided_slice %16 {offsets = [0, 1, 0], sizes = [8, 8, 8], strides = [1, 1, 1]} : vector<10x10x8xf32> to vector<8x8x8xf32>
    %20 = vector.shape_cast %19 : vector<8x8x8xf32> to vector<64x8xf32>
    %21 = vector.extract_strided_slice %16 {offsets = [0, 2, 0], sizes = [8, 8, 8], strides = [1, 1, 1]} : vector<10x10x8xf32> to vector<8x8x8xf32>
    %22 = vector.shape_cast %21 : vector<8x8x8xf32> to vector<64x8xf32>
    %23 = vector.extract_strided_slice %16 {offsets = [1, 0, 0], sizes = [8, 8, 8], strides = [1, 1, 1]} : vector<10x10x8xf32> to vector<8x8x8xf32>
    %24 = vector.shape_cast %23 : vector<8x8x8xf32> to vector<64x8xf32>
    %25 = vector.extract_strided_slice %16 {offsets = [1, 1, 0], sizes = [8, 8, 8], strides = [1, 1, 1]} : vector<10x10x8xf32> to vector<8x8x8xf32>
    %26 = vector.shape_cast %25 : vector<8x8x8xf32> to vector<64x8xf32>
    %27 = vector.extract_strided_slice %16 {offsets = [1, 2, 0], sizes = [8, 8, 8], strides = [1, 1, 1]} : vector<10x10x8xf32> to vector<8x8x8xf32>
    %28 = vector.shape_cast %27 : vector<8x8x8xf32> to vector<64x8xf32>
    %29 = vector.extract_strided_slice %16 {offsets = [2, 0, 0], sizes = [8, 8, 8], strides = [1, 1, 1]} : vector<10x10x8xf32> to vector<8x8x8xf32>
    %30 = vector.shape_cast %29 : vector<8x8x8xf32> to vector<64x8xf32>
    %31 = vector.extract_strided_slice %16 {offsets = [2, 1, 0], sizes = [8, 8, 8], strides = [1, 1, 1]} : vector<10x10x8xf32> to vector<8x8x8xf32>
    %32 = vector.shape_cast %31 : vector<8x8x8xf32> to vector<64x8xf32>
    %33 = vector.extract_strided_slice %16 {offsets = [2, 2, 0], sizes = [8, 8, 8], strides = [1, 1, 1]} : vector<10x10x8xf32> to vector<8x8x8xf32>
    %34 = vector.shape_cast %33 : vector<8x8x8xf32> to vector<64x8xf32>
    %35 = tpu.concatenate %18, %20, %22, %24, %26, %28, %30, %32, %34 in 1 : vector<64x8xf32>, vector<64x8xf32>, vector<64x8xf32>, vector<64x8xf32>, vector<64x8xf32>, vector<64x8xf32>, vector<64x8xf32>, vector<64x8xf32>, vector<64x8xf32> -> vector<64x72xf32>
    %36 = arith.truncf %35 : vector<64x72xf32> to vector<64x72xbf16>
    %c0_10 = arith.constant 0 : index
    %c0_11 = arith.constant 0 : index
    %37 = vector.load %arg3[%c0_10, %c0_11] : memref<72x8xbf16, #tpu.memory_space<vmem>>, vector<72x8xbf16>
    %cst_12 = arith.constant dense<0.000000e+00> : vector<64x8xf32>
    %38 = tpu.matmul %36, %37, %cst_12 {dimension_numbers = #tpu.dot_dimension_numbers<[1], [0], [0], [1], [0, 0, 1, 1], [], []>} : vector<64x72xbf16>, vector<72x8xbf16>, vector<64x8xf32> -> vector<64x8xf32>
    %c0_13 = arith.constant 0 : index
    %c0_14 = arith.constant 0 : index
    %39 = vector.load %arg7[%c0_13, %c0_14] : memref<1x8xf32, #tpu.memory_space<vmem>>, vector<1x8xf32>
    %40 = vector.broadcast %39 : vector<1x8xf32> to vector<64x8xf32>
    %41 = arith.mulf %38, %40 : vector<64x8xf32>
    %c0_15 = arith.constant 0 : index
    %c0_16 = arith.constant 0 : index
    %42 = vector.load %arg8[%c0_15, %c0_16] : memref<1x8xf32, #tpu.memory_space<vmem>>, vector<1x8xf32>
    %43 = vector.broadcast %42 : vector<1x8xf32> to vector<64x8xf32>
    %44 = arith.addf %41, %43 : vector<64x8xf32>
    %cst_17 = arith.constant 0.000000e+00 : f32
    %45 = vector.broadcast %cst_17 : f32 to vector<64x8xf32>
    %46 = arith.maximumf %44, %45 : vector<64x8xf32>
    %47 = arith.truncf %46 : vector<64x8xf32> to vector<64x8xbf16>
    %c0_18 = arith.constant 0 : index
    %c0_19 = arith.constant 0 : index
    %48 = vector.load %arg4[%c0_18, %c0_19] : memref<8x32xbf16, #tpu.memory_space<vmem>>, vector<8x32xbf16>
    %cst_20 = arith.constant dense<0.000000e+00> : vector<64x32xf32>
    %49 = tpu.matmul %47, %48, %cst_20 {dimension_numbers = #tpu.dot_dimension_numbers<[1], [0], [0], [1], [0, 0, 1, 1], [], []>} : vector<64x8xbf16>, vector<8x32xbf16>, vector<64x32xf32> -> vector<64x32xf32>
    %c0_21 = arith.constant 0 : index
    %c0_22 = arith.constant 0 : index
    %50 = vector.load %arg9[%c0_21, %c0_22] : memref<1x32xf32, #tpu.memory_space<vmem>>, vector<1x32xf32>
    %51 = vector.broadcast %50 : vector<1x32xf32> to vector<64x32xf32>
    %52 = arith.mulf %49, %51 : vector<64x32xf32>
    %c0_23 = arith.constant 0 : index
    %c0_24 = arith.constant 0 : index
    %53 = vector.load %arg10[%c0_23, %c0_24] : memref<1x32xf32, #tpu.memory_space<vmem>>, vector<1x32xf32>
    %54 = vector.broadcast %53 : vector<1x32xf32> to vector<64x32xf32>
    %55 = arith.addf %52, %54 : vector<64x32xf32>
    %56 = vector.shape_cast %55 : vector<64x32xf32> to vector<8x8x32xf32>
    %cst_25 = arith.constant dense<0xFF800000> : vector<8x8xf32>
    %57 = vector.multi_reduction <maximumf>, %56, %cst_25 [2] : vector<8x8x32xf32> to vector<8x8xf32>
    %cst_26 = arith.constant dense<0.000000e+00> : vector<8x8xf32>
    %58 = vector.multi_reduction <add>, %56, %cst_26 [2] : vector<8x8x32xf32> to vector<8x8xf32>
    %cst_27 = arith.constant 3.200000e+01 : f32
    %59 = vector.broadcast %cst_27 : f32 to vector<8x8xf32>
    %60 = arith.divf %58, %59 : vector<8x8xf32>
    %c0_28 = arith.constant 0 : index
    %c0_29 = arith.constant 0 : index
    %61 = vector.load %arg11[%c0_28, %c0_29] : memref<112x8xf32, #tpu.memory_space<vmem>>, vector<112x8xf32>
    %c0_30 = arith.constant 0 : index
    %62 = memref.load %arg14[%c0_30] : memref<3xf32, #tpu.memory_space<smem>>
    %cst_31 = arith.constant 0.000000e+00 : f32
    %63 = vector.broadcast %cst_31 : f32 to vector<3x8xf32>
    %64 = tpu.concatenate %63, %57, %63 in 0 : vector<3x8xf32>, vector<8x8xf32>, vector<3x8xf32> -> vector<14x8xf32>
    %65 = tpu.concatenate %63, %60, %63 in 0 : vector<3x8xf32>, vector<8x8xf32>, vector<3x8xf32> -> vector<14x8xf32>
    %66 = vector.extract_strided_slice %64 {offsets = [0, 0], sizes = [8, 8], strides = [1, 1]} : vector<14x8xf32> to vector<8x8xf32>
    %67 = vector.extract_strided_slice %65 {offsets = [0, 0], sizes = [8, 8], strides = [1, 1]} : vector<14x8xf32> to vector<8x8xf32>
    %68 = vector.extract_strided_slice %64 {offsets = [1, 0], sizes = [8, 8], strides = [1, 1]} : vector<14x8xf32> to vector<8x8xf32>
    %69 = vector.extract_strided_slice %65 {offsets = [1, 0], sizes = [8, 8], strides = [1, 1]} : vector<14x8xf32> to vector<8x8xf32>
    %70 = vector.extract_strided_slice %64 {offsets = [2, 0], sizes = [8, 8], strides = [1, 1]} : vector<14x8xf32> to vector<8x8xf32>
    %71 = vector.extract_strided_slice %65 {offsets = [2, 0], sizes = [8, 8], strides = [1, 1]} : vector<14x8xf32> to vector<8x8xf32>
    %72 = vector.extract_strided_slice %64 {offsets = [3, 0], sizes = [8, 8], strides = [1, 1]} : vector<14x8xf32> to vector<8x8xf32>
    %73 = vector.extract_strided_slice %65 {offsets = [3, 0], sizes = [8, 8], strides = [1, 1]} : vector<14x8xf32> to vector<8x8xf32>
    %74 = vector.extract_strided_slice %64 {offsets = [4, 0], sizes = [8, 8], strides = [1, 1]} : vector<14x8xf32> to vector<8x8xf32>
    %75 = vector.extract_strided_slice %65 {offsets = [4, 0], sizes = [8, 8], strides = [1, 1]} : vector<14x8xf32> to vector<8x8xf32>
    %76 = vector.extract_strided_slice %64 {offsets = [5, 0], sizes = [8, 8], strides = [1, 1]} : vector<14x8xf32> to vector<8x8xf32>
    %77 = vector.extract_strided_slice %65 {offsets = [5, 0], sizes = [8, 8], strides = [1, 1]} : vector<14x8xf32> to vector<8x8xf32>
    %78 = vector.extract_strided_slice %64 {offsets = [6, 0], sizes = [8, 8], strides = [1, 1]} : vector<14x8xf32> to vector<8x8xf32>
    %79 = vector.extract_strided_slice %65 {offsets = [6, 0], sizes = [8, 8], strides = [1, 1]} : vector<14x8xf32> to vector<8x8xf32>
    %80 = tpu.concatenate %66, %67, %68, %69, %70, %71, %72, %73, %74, %75, %76, %77, %78, %79 in 1 : vector<8x8xf32>, vector<8x8xf32>, vector<8x8xf32>, vector<8x8xf32>, vector<8x8xf32>, vector<8x8xf32>, vector<8x8xf32>, vector<8x8xf32>, vector<8x8xf32>, vector<8x8xf32>, vector<8x8xf32>, vector<8x8xf32>, vector<8x8xf32>, vector<8x8xf32> -> vector<8x112xf32>
    %cst_32 = arith.constant dense<0.000000e+00> : vector<8x8xf32>
    %81 = tpu.matmul %80, %61, %cst_32 {dimension_numbers = #tpu.dot_dimension_numbers<[1], [0], [0], [1], [0, 0, 1, 1], [], []>} : vector<8x112xf32>, vector<112x8xf32>, vector<8x8xf32> -> vector<8x8xf32>
    %82 = vector.broadcast %62 : f32 to vector<8x8xf32>
    %83 = arith.addf %81, %82 : vector<8x8xf32>
    %cst_33 = arith.constant 0.000000e+00 : f32
    %84 = vector.broadcast %cst_33 : f32 to vector<8x8xf32>
    %85 = arith.subf %84, %83 : vector<8x8xf32>
    %86 = math.exp %85 : vector<8x8xf32>
    %cst_34 = arith.constant 1.000000e+00 : f32
    %87 = vector.broadcast %cst_34 : f32 to vector<8x8xf32>
    %88 = arith.addf %87, %86 : vector<8x8xf32>
    %cst_35 = arith.constant 1.000000e+00 : f32
    %89 = vector.broadcast %cst_35 : f32 to vector<8x8xf32>
    %90 = arith.divf %89, %88 : vector<8x8xf32>
    %cst_36 = arith.constant dense<0xFF800000> : vector<8x32xf32>
    %91 = vector.multi_reduction <maximumf>, %56, %cst_36 [0] : vector<8x8x32xf32> to vector<8x32xf32>
    %cst_37 = arith.constant dense<0.000000e+00> : vector<8x32xf32>
    %92 = vector.multi_reduction <add>, %56, %cst_37 [0] : vector<8x8x32xf32> to vector<8x32xf32>
    %cst_38 = arith.constant 8.000000e+00 : f32
    %93 = vector.broadcast %cst_38 : f32 to vector<8x32xf32>
    %94 = arith.divf %92, %93 : vector<8x32xf32>
    %c0_39 = arith.constant 0 : index
    %c0_40 = arith.constant 0 : index
    %95 = vector.load %arg12[%c0_39, %c0_40] : memref<448x32xf32, #tpu.memory_space<vmem>>, vector<448x32xf32>
    %c1 = arith.constant 1 : index
    %96 = memref.load %arg14[%c1] : memref<3xf32, #tpu.memory_space<smem>>
    %cst_41 = arith.constant 0.000000e+00 : f32
    %97 = vector.broadcast %cst_41 : f32 to vector<3x32xf32>
    %98 = tpu.concatenate %97, %91, %97 in 0 : vector<3x32xf32>, vector<8x32xf32>, vector<3x32xf32> -> vector<14x32xf32>
    %99 = tpu.concatenate %97, %94, %97 in 0 : vector<3x32xf32>, vector<8x32xf32>, vector<3x32xf32> -> vector<14x32xf32>
    %100 = vector.extract_strided_slice %98 {offsets = [0, 0], sizes = [8, 32], strides = [1, 1]} : vector<14x32xf32> to vector<8x32xf32>
    %101 = vector.extract_strided_slice %99 {offsets = [0, 0], sizes = [8, 32], strides = [1, 1]} : vector<14x32xf32> to vector<8x32xf32>
    %102 = vector.extract_strided_slice %98 {offsets = [1, 0], sizes = [8, 32], strides = [1, 1]} : vector<14x32xf32> to vector<8x32xf32>
    %103 = vector.extract_strided_slice %99 {offsets = [1, 0], sizes = [8, 32], strides = [1, 1]} : vector<14x32xf32> to vector<8x32xf32>
    %104 = vector.extract_strided_slice %98 {offsets = [2, 0], sizes = [8, 32], strides = [1, 1]} : vector<14x32xf32> to vector<8x32xf32>
    %105 = vector.extract_strided_slice %99 {offsets = [2, 0], sizes = [8, 32], strides = [1, 1]} : vector<14x32xf32> to vector<8x32xf32>
    %106 = vector.extract_strided_slice %98 {offsets = [3, 0], sizes = [8, 32], strides = [1, 1]} : vector<14x32xf32> to vector<8x32xf32>
    %107 = vector.extract_strided_slice %99 {offsets = [3, 0], sizes = [8, 32], strides = [1, 1]} : vector<14x32xf32> to vector<8x32xf32>
    %108 = vector.extract_strided_slice %98 {offsets = [4, 0], sizes = [8, 32], strides = [1, 1]} : vector<14x32xf32> to vector<8x32xf32>
    %109 = vector.extract_strided_slice %99 {offsets = [4, 0], sizes = [8, 32], strides = [1, 1]} : vector<14x32xf32> to vector<8x32xf32>
    %110 = vector.extract_strided_slice %98 {offsets = [5, 0], sizes = [8, 32], strides = [1, 1]} : vector<14x32xf32> to vector<8x32xf32>
    %111 = vector.extract_strided_slice %99 {offsets = [5, 0], sizes = [8, 32], strides = [1, 1]} : vector<14x32xf32> to vector<8x32xf32>
    %112 = vector.extract_strided_slice %98 {offsets = [6, 0], sizes = [8, 32], strides = [1, 1]} : vector<14x32xf32> to vector<8x32xf32>
    %113 = vector.extract_strided_slice %99 {offsets = [6, 0], sizes = [8, 32], strides = [1, 1]} : vector<14x32xf32> to vector<8x32xf32>
    %114 = tpu.concatenate %100, %101, %102, %103, %104, %105, %106, %107, %108, %109, %110, %111, %112, %113 in 1 : vector<8x32xf32>, vector<8x32xf32>, vector<8x32xf32>, vector<8x32xf32>, vector<8x32xf32>, vector<8x32xf32>, vector<8x32xf32>, vector<8x32xf32>, vector<8x32xf32>, vector<8x32xf32>, vector<8x32xf32>, vector<8x32xf32>, vector<8x32xf32>, vector<8x32xf32> -> vector<8x448xf32>
    %cst_42 = arith.constant dense<0.000000e+00> : vector<8x32xf32>
    %115 = tpu.matmul %114, %95, %cst_42 {dimension_numbers = #tpu.dot_dimension_numbers<[1], [0], [0], [1], [0, 0, 1, 1], [], []>} : vector<8x448xf32>, vector<448x32xf32>, vector<8x32xf32> -> vector<8x32xf32>
    %116 = vector.broadcast %96 : f32 to vector<8x32xf32>
    %117 = arith.addf %115, %116 : vector<8x32xf32>
    %cst_43 = arith.constant 0.000000e+00 : f32
    %118 = vector.broadcast %cst_43 : f32 to vector<8x32xf32>
    %119 = arith.subf %118, %117 : vector<8x32xf32>
    %120 = math.exp %119 : vector<8x32xf32>
    %cst_44 = arith.constant 1.000000e+00 : f32
    %121 = vector.broadcast %cst_44 : f32 to vector<8x32xf32>
    %122 = arith.addf %121, %120 : vector<8x32xf32>
    %cst_45 = arith.constant 1.000000e+00 : f32
    %123 = vector.broadcast %cst_45 : f32 to vector<8x32xf32>
    %124 = arith.divf %123, %122 : vector<8x32xf32>
    %cst_46 = arith.constant dense<0xFF800000> : vector<8x32xf32>
    %125 = vector.multi_reduction <maximumf>, %56, %cst_46 [1] : vector<8x8x32xf32> to vector<8x32xf32>
    %cst_47 = arith.constant dense<0.000000e+00> : vector<8x32xf32>
    %126 = vector.multi_reduction <add>, %56, %cst_47 [1] : vector<8x8x32xf32> to vector<8x32xf32>
    %cst_48 = arith.constant 8.000000e+00 : f32
    %127 = vector.broadcast %cst_48 : f32 to vector<8x32xf32>
    %128 = arith.divf %126, %127 : vector<8x32xf32>
    %c0_49 = arith.constant 0 : index
    %c0_50 = arith.constant 0 : index
    %129 = vector.load %arg13[%c0_49, %c0_50] : memref<448x32xf32, #tpu.memory_space<vmem>>, vector<448x32xf32>
    %c2 = arith.constant 2 : index
    %130 = memref.load %arg14[%c2] : memref<3xf32, #tpu.memory_space<smem>>
    %cst_51 = arith.constant 0.000000e+00 : f32
    %131 = vector.broadcast %cst_51 : f32 to vector<3x32xf32>
    %132 = tpu.concatenate %131, %125, %131 in 0 : vector<3x32xf32>, vector<8x32xf32>, vector<3x32xf32> -> vector<14x32xf32>
    %133 = tpu.concatenate %131, %128, %131 in 0 : vector<3x32xf32>, vector<8x32xf32>, vector<3x32xf32> -> vector<14x32xf32>
    %134 = vector.extract_strided_slice %132 {offsets = [0, 0], sizes = [8, 32], strides = [1, 1]} : vector<14x32xf32> to vector<8x32xf32>
    %135 = vector.extract_strided_slice %133 {offsets = [0, 0], sizes = [8, 32], strides = [1, 1]} : vector<14x32xf32> to vector<8x32xf32>
    %136 = vector.extract_strided_slice %132 {offsets = [1, 0], sizes = [8, 32], strides = [1, 1]} : vector<14x32xf32> to vector<8x32xf32>
    %137 = vector.extract_strided_slice %133 {offsets = [1, 0], sizes = [8, 32], strides = [1, 1]} : vector<14x32xf32> to vector<8x32xf32>
    %138 = vector.extract_strided_slice %132 {offsets = [2, 0], sizes = [8, 32], strides = [1, 1]} : vector<14x32xf32> to vector<8x32xf32>
    %139 = vector.extract_strided_slice %133 {offsets = [2, 0], sizes = [8, 32], strides = [1, 1]} : vector<14x32xf32> to vector<8x32xf32>
    %140 = vector.extract_strided_slice %132 {offsets = [3, 0], sizes = [8, 32], strides = [1, 1]} : vector<14x32xf32> to vector<8x32xf32>
    %141 = vector.extract_strided_slice %133 {offsets = [3, 0], sizes = [8, 32], strides = [1, 1]} : vector<14x32xf32> to vector<8x32xf32>
    %142 = vector.extract_strided_slice %132 {offsets = [4, 0], sizes = [8, 32], strides = [1, 1]} : vector<14x32xf32> to vector<8x32xf32>
    %143 = vector.extract_strided_slice %133 {offsets = [4, 0], sizes = [8, 32], strides = [1, 1]} : vector<14x32xf32> to vector<8x32xf32>
    %144 = vector.extract_strided_slice %132 {offsets = [5, 0], sizes = [8, 32], strides = [1, 1]} : vector<14x32xf32> to vector<8x32xf32>
    %145 = vector.extract_strided_slice %133 {offsets = [5, 0], sizes = [8, 32], strides = [1, 1]} : vector<14x32xf32> to vector<8x32xf32>
    %146 = vector.extract_strided_slice %132 {offsets = [6, 0], sizes = [8, 32], strides = [1, 1]} : vector<14x32xf32> to vector<8x32xf32>
    %147 = vector.extract_strided_slice %133 {offsets = [6, 0], sizes = [8, 32], strides = [1, 1]} : vector<14x32xf32> to vector<8x32xf32>
    %148 = tpu.concatenate %134, %135, %136, %137, %138, %139, %140, %141, %142, %143, %144, %145, %146, %147 in 1 : vector<8x32xf32>, vector<8x32xf32>, vector<8x32xf32>, vector<8x32xf32>, vector<8x32xf32>, vector<8x32xf32>, vector<8x32xf32>, vector<8x32xf32>, vector<8x32xf32>, vector<8x32xf32>, vector<8x32xf32>, vector<8x32xf32>, vector<8x32xf32>, vector<8x32xf32> -> vector<8x448xf32>
    %cst_52 = arith.constant dense<0.000000e+00> : vector<8x32xf32>
    %149 = tpu.matmul %148, %129, %cst_52 {dimension_numbers = #tpu.dot_dimension_numbers<[1], [0], [0], [1], [0, 0, 1, 1], [], []>} : vector<8x448xf32>, vector<448x32xf32>, vector<8x32xf32> -> vector<8x32xf32>
    %150 = vector.broadcast %130 : f32 to vector<8x32xf32>
    %151 = arith.addf %149, %150 : vector<8x32xf32>
    %cst_53 = arith.constant 0.000000e+00 : f32
    %152 = vector.broadcast %cst_53 : f32 to vector<8x32xf32>
    %153 = arith.subf %152, %151 : vector<8x32xf32>
    %154 = math.exp %153 : vector<8x32xf32>
    %cst_54 = arith.constant 1.000000e+00 : f32
    %155 = vector.broadcast %cst_54 : f32 to vector<8x32xf32>
    %156 = arith.addf %155, %154 : vector<8x32xf32>
    %cst_55 = arith.constant 1.000000e+00 : f32
    %157 = vector.broadcast %cst_55 : f32 to vector<8x32xf32>
    %158 = arith.divf %157, %156 : vector<8x32xf32>
    %159 = vector.shape_cast %90 : vector<8x8xf32> to vector<8x8x1xf32>
    %160 = vector.broadcast %159 : vector<8x8x1xf32> to vector<8x8x32xf32>
    %161 = arith.mulf %56, %160 : vector<8x8x32xf32>
    %162 = vector.shape_cast %124 : vector<8x32xf32> to vector<1x8x32xf32>
    %163 = vector.broadcast %162 : vector<1x8x32xf32> to vector<8x8x32xf32>
    %164 = arith.mulf %56, %163 : vector<8x8x32xf32>
    %165 = arith.addf %161, %164 : vector<8x8x32xf32>
    %166 = vector.shape_cast %158 : vector<8x32xf32> to vector<8x1x32xf32>
    %167 = vector.broadcast %166 : vector<8x1x32xf32> to vector<8x8x32xf32>
    %168 = arith.mulf %56, %167 : vector<8x8x32xf32>
    %169 = arith.addf %165, %168 : vector<8x8x32xf32>
    %cst_56 = arith.constant 0.333333343 : f32
    %170 = vector.broadcast %cst_56 : f32 to vector<8x8x32xf32>
    %171 = arith.mulf %169, %170 : vector<8x8x32xf32>
    %172 = vector.shape_cast %171 : vector<8x8x32xf32> to vector<64x32xf32>
    %173 = arith.addf %172, %0 : vector<64x32xf32>
    %cst_57 = arith.constant 0.000000e+00 : f32
    %174 = vector.broadcast %cst_57 : f32 to vector<64x32xf32>
    %175 = arith.maximumf %173, %174 : vector<64x32xf32>
    %c0_58 = arith.constant 0 : index
    %c0_59 = arith.constant 0 : index
    %176 = vector.load %arg15[%c0_58, %c0_59] : memref<64x32xf32, #tpu.memory_space<vmem>>, vector<64x32xf32>
    tpu.vector_store %arg15[%c0_58, %c0_59], %175 {strides = array<i32>} : memref<64x32xf32, #tpu.memory_space<vmem>>, vector<64x32xf32>,
    return
  }
  func.func @transform_0(%arg0: i32) -> (i32, i32) {
    %c0_i32 = arith.constant 0 : i32
    %c0_i32_0 = arith.constant 0 : i32
    return %arg0, %c0_i32 : i32, i32
  }
  func.func @transform_1(%arg0: i32) -> (i32, i32) {
    %c0_i32 = arith.constant 0 : i32
    %c0_i32_0 = arith.constant 0 : i32
    %c0_i32_1 = arith.constant 0 : i32
    return %c0_i32, %c0_i32_0 : i32, i32
  }
  func.func @transform_2(%arg0: i32) -> (i32, i32) {
    %c0_i32 = arith.constant 0 : i32
    %c0_i32_0 = arith.constant 0 : i32
    %c0_i32_1 = arith.constant 0 : i32
    return %c0_i32, %c0_i32_0 : i32, i32
  }
  func.func @transform_3(%arg0: i32) -> (i32, i32) {
    %c0_i32 = arith.constant 0 : i32
    %c0_i32_0 = arith.constant 0 : i32
    %c0_i32_1 = arith.constant 0 : i32
    return %c0_i32, %c0_i32_0 : i32, i32
  }
  func.func @transform_4(%arg0: i32) -> (i32, i32) {
    %c0_i32 = arith.constant 0 : i32
    %c0_i32_0 = arith.constant 0 : i32
    %c0_i32_1 = arith.constant 0 : i32
    return %c0_i32, %c0_i32_0 : i32, i32
  }
  func.func @transform_5(%arg0: i32) -> (i32, i32) {
    %c0_i32 = arith.constant 0 : i32
    %c0_i32_0 = arith.constant 0 : i32
    %c0_i32_1 = arith.constant 0 : i32
    return %c0_i32, %c0_i32_0 : i32, i32
  }
  func.func @transform_6(%arg0: i32) -> (i32, i32) {
    %c0_i32 = arith.constant 0 : i32
    %c0_i32_0 = arith.constant 0 : i32
    %c0_i32_1 = arith.constant 0 : i32
    return %c0_i32, %c0_i32_0 : i32, i32
  }
  func.func @transform_7(%arg0: i32) -> (i32, i32) {
    %c0_i32 = arith.constant 0 : i32
    %c0_i32_0 = arith.constant 0 : i32
    %c0_i32_1 = arith.constant 0 : i32
    return %c0_i32, %c0_i32_0 : i32, i32
  }
  func.func @transform_8(%arg0: i32) -> (i32, i32) {
    %c0_i32 = arith.constant 0 : i32
    %c0_i32_0 = arith.constant 0 : i32
    %c0_i32_1 = arith.constant 0 : i32
    return %c0_i32, %c0_i32_0 : i32, i32
  }
  func.func @transform_9(%arg0: i32) -> (i32, i32) {
    %c0_i32 = arith.constant 0 : i32
    %c0_i32_0 = arith.constant 0 : i32
    %c0_i32_1 = arith.constant 0 : i32
    return %c0_i32, %c0_i32_0 : i32, i32
  }
  func.func @transform_10(%arg0: i32) -> (i32, i32) {
    %c0_i32 = arith.constant 0 : i32
    %c0_i32_0 = arith.constant 0 : i32
    %c0_i32_1 = arith.constant 0 : i32
    return %c0_i32, %c0_i32_0 : i32, i32
  }
  func.func @transform_11(%arg0: i32) -> (i32, i32) {
    %c0_i32 = arith.constant 0 : i32
    %c0_i32_0 = arith.constant 0 : i32
    %c0_i32_1 = arith.constant 0 : i32
    return %c0_i32, %c0_i32_0 : i32, i32
  }
  func.func @transform_12(%arg0: i32) -> (i32, i32) {
    %c0_i32 = arith.constant 0 : i32
    %c0_i32_0 = arith.constant 0 : i32
    %c0_i32_1 = arith.constant 0 : i32
    return %c0_i32, %c0_i32_0 : i32, i32
  }
  func.func @transform_13(%arg0: i32) -> i32 {
    %c0_i32 = arith.constant 0 : i32
    %c0_i32_0 = arith.constant 0 : i32
    return %c0_i32 : i32
  }
  func.func @transform_14(%arg0: i32) -> (i32, i32) {
    %c0_i32 = arith.constant 0 : i32
    %c0_i32_0 = arith.constant 0 : i32
    return %arg0, %c0_i32 : i32, i32
  }
}

</mosaic_0001>

<llo_original>
// kernel: tpu_custom_call.1
$region0: #{tpu_custom_call.1}
  #allocation0 [shape = 'u32[]', space=smem, size = 0x4, offset = 0x4, fixed_abs, tag = 'smem constant byte address 0x4 - core index']
  #allocation1 [shape = 'u32[72,128]{1,0:T(1,128)}', space=vmem, size = 0x9000, scoped, tag = 'internal scratch']
  %s0 = inlined_call_operand.vmem [shape: f32[128,32], index: 0, kind: input, shape index: {}]
  %s1 = inlined_call_operand.vmem [shape: bf16[32,8], index: 1, kind: input, shape index: {}]
  %s2 = inlined_call_operand.vmem [shape: bf16[72,8], index: 2, kind: input, shape index: {}]
  %s3 = inlined_call_operand.vmem [shape: bf16[8,32], index: 3, kind: input, shape index: {}]
  %s4 = inlined_call_operand.vmem [shape: f32[1,8], index: 4, kind: input, shape index: {}]
  %s5 = inlined_call_operand.vmem [shape: f32[1,8], index: 5, kind: input, shape index: {}]
  %s6 = inlined_call_operand.vmem [shape: f32[1,8], index: 6, kind: input, shape index: {}]
  %s7 = inlined_call_operand.vmem [shape: f32[1,8], index: 7, kind: input, shape index: {}]
  %s8 = inlined_call_operand.vmem [shape: f32[1,32], index: 8, kind: input, shape index: {}]
  %s9 = inlined_call_operand.vmem [shape: f32[1,32], index: 9, kind: input, shape index: {}]
  %s10 = inlined_call_operand.vmem [shape: f32[112,8], index: 10, kind: input, shape index: {}]
  %s11 = inlined_call_operand.vmem [shape: f32[448,32], index: 11, kind: input, shape index: {}]
  %s12 = inlined_call_operand.vmem [shape: f32[448,32], index: 12, kind: input, shape index: {}]
  %s13 = inlined_call_operand.vmem [shape: f32[3], index: 13, kind: input, shape index: {}]
  %s14 = inlined_call_operand.vmem [shape: f32[128,32], index: 14, kind: output, shape index: {}]
  %s15 = sld [smem:[#allocation0]]
  $region93: #{tpu_custom_call.1} parent=0
    _
  %s17 = ssub.s32 1, %s15
  %s18 = scalar_select 0, %s17, %s15
  $region1: #{tpu_custom_call.1} parent=0
    #allocation2 [shape = 'u8[512]{0}', space=smem, size = 0x200, scoped, tag = 'input window, operand 13, single buffered']
    #allocation3 [shape = 's32[2]{0}', space=sflag, size = 0x8, scoped, tag = 'scoped memory for tpu_custom_call.1']
    %19 = vsyncpa [#allocation3], 0
    loop: start=0, step=1, limit=4
    $region2: #{tpu_custom_call.1} parent=1 // loop_pre_header
      _
    $region3: #{tpu_custom_call.1} parent=1 // loop_header
      %s21 = sphi 0, %s25
      %p22 = scmp.ge.s32.totalorder %s21, 4
      %s31 = sphi 0, %s33
      %s34 = sphi 0, %s31
      %s35 = sphi 0, %s34
      %s51 = sphi 0, %s35
      %s55 = sphi 0, %s55
      %s57 = sphi 0, %s55
      %s58 = sphi 0, %s57
      %s72 = sphi 0, %s58
      %s76 = sphi 0, %s76
      %s78 = sphi 0, %s76
      %s79 = sphi 0, %s78
      %s93 = sphi 0, %s79
      %s97 = sphi 0, %s97
      %s99 = sphi 0, %s97
      %s100 = sphi 0, %s99
      %s114 = sphi 0, %s100
      %s118 = sphi 0, %s118
      %s120 = sphi 0, %s118
      %s121 = sphi 0, %s120
      %s135 = sphi 0, %s121
      %s139 = sphi 0, %s139
      %s141 = sphi 0, %s139
      %s142 = sphi 0, %s141
      %s156 = sphi 0, %s142
      %s160 = sphi 0, %s160
      %s162 = sphi 0, %s160
      %s163 = sphi 0, %s162
      %s177 = sphi 0, %s163
      %s181 = sphi 0, %s181
      %s183 = sphi 0, %s181
      %s184 = sphi 0, %s183
      %s198 = sphi 0, %s184
      %s202 = sphi 0, %s202
      %s204 = sphi 0, %s202
      %s205 = sphi 0, %s204
      %s219 = sphi 0, %s205
      %s223 = sphi 0, %s223
      %s225 = sphi 0, %s223
      %s226 = sphi 0, %s225
      %s240 = sphi 0, %s226
      %s244 = sphi 0, %s244
      %s246 = sphi 0, %s244
      %s247 = sphi 0, %s246
      %s261 = sphi 0, %s247
      %s265 = sphi 0, %s265
      %s267 = sphi 0, %s265
      %s268 = sphi 0, %s267
      %s282 = sphi 0, %s268
      %s286 = sphi 0, %s286
      %s288 = sphi 0, %s286
      %s289 = sphi 0, %s288
      %s303 = sphi 0, %s289
      %s307 = sphi 0, %s307
      %s309 = sphi 0, %s307
      %s310 = sphi 0, %s309
      %s324 = sphi 0, %s310
      %s330 = sphi 0, %s332
      %s333 = sphi 0, %s330
      %s334 = sphi 0, %s333
      %s350 = sphi 0, %s334
    $region4: #{tpu_custom_call.1} parent=1 // loop_header_branch
      %24 = sbr.rel (%p22) target = $region8
    $region5: #{tpu_custom_call.1} parent=1 // loop_body
      %s26 = ssub.s32 %s21, 1
      %s27 = ssub.s32 %s21, 2
      %s28 = sadd.s32 %s21, 1
      %s29 = ssub.s32 %s21, %s28
      %p30 = scmp.eq.s32.totalorder %s29, 0
      %s32 = sadd.s32 %s31, 1
      %s33 = scalar_select %p30, %s31, %s32
      %p36 = pneg %p30
      %p37 = scmp.eq.s32.totalorder %s21, 1
      %p38 = por %p36, %p37
      %p39 = scmp.ne.s32.totalorder %s31, %s34
      %p40 = scmp.eq.s32.totalorder %s21, 0
      %p41 = por %p39, %p40
      %p42 = scmp.ne.s32.totalorder %s31, %s34
      %p43 = scmp.eq.s32.totalorder %s26, 1
      %p44 = por %p42, %p43
      %p45 = scmp.ne.s32.totalorder %s34, %s35
      %p46 = scmp.eq.s32.totalorder %s26, 0
      %p47 = por %p45, %p46
      %p48 = scmp.ne.s32.totalorder %s34, %s35
      %p49 = scmp.eq.s32.totalorder %s27, 1
      %p50 = por %p48, %p49
      %p52 = scmp.ne.s32.totalorder %s35, %s51
      %p53 = scmp.eq.s32.totalorder %s27, 0
      %p54 = por %p52, %p53
      %s56 = sadd.s32 %s55, 1
      %p59 = scmp.eq.s32.totalorder %s21, 1
      %p60 = scmp.ne.s32.totalorder %s55, %s57
      %p61 = scmp.eq.s32.totalorder %s21, 0
      %p62 = por %p60, %p61
      %p63 = scmp.ne.s32.totalorder %s55, %s57
      %p64 = scmp.eq.s32.totalorder %s26, 1
      %p65 = por %p63, %p64
      %p66 = scmp.ne.s32.totalorder %s57, %s58
      %p67 = scmp.eq.s32.totalorder %s26, 0
      %p68 = por %p66, %p67
      %p69 = scmp.ne.s32.totalorder %s57, %s58
      %p70 = scmp.eq.s32.totalorder %s27, 1
      %p71 = por %p69, %p70
      %p73 = scmp.ne.s32.totalorder %s58, %s72
      %p74 = scmp.eq.s32.totalorder %s27, 0
      %p75 = por %p73, %p74
      %s77 = sadd.s32 %s76, 1
      %p80 = scmp.eq.s32.totalorder %s21, 1
      %p81 = scmp.ne.s32.totalorder %s76, %s78
      %p82 = scmp.eq.s32.totalorder %s21, 0
      %p83 = por %p81, %p82
      %p84 = scmp.ne.s32.totalorder %s76, %s78
      %p85 = scmp.eq.s32.totalorder %s26, 1
      %p86 = por %p84, %p85
      %p87 = scmp.ne.s32.totalorder %s78, %s79
      %p88 = scmp.eq.s32.totalorder %s26, 0
      %p89 = por %p87, %p88
      %p90 = scmp.ne.s32.totalorder %s78, %s79
      %p91 = scmp.eq.s32.totalorder %s27, 1
      %p92 = por %p90, %p91
      %p94 = scmp.ne.s32.totalorder %s79, %s93
      %p95 = scmp.eq.s32.totalorder %s27, 0
      %p96 = por %p94, %p95
      %s98 = sadd.s32 %s97, 1
      %p101 = scmp.eq.s32.totalorder %s21, 1
      %p102 = scmp.ne.s32.totalorder %s97, %s99
      %p103 = scmp.eq.s32.totalorder %s21, 0
      %p104 = por %p102, %p103
      %p105 = scmp.ne.s32.totalorder %s97, %s99
      %p106 = scmp.eq.s32.totalorder %s26, 1
      %p107 = por %p105, %p106
      %p108 = scmp.ne.s32.totalorder %s99, %s100
      %p109 = scmp.eq.s32.totalorder %s26, 0
      %p110 = por %p108, %p109
      %p111 = scmp.ne.s32.totalorder %s99, %s100
      %p112 = scmp.eq.s32.totalorder %s27, 1
      %p113 = por %p111, %p112
      %p115 = scmp.ne.s32.totalorder %s100, %s114
      %p116 = scmp.eq.s32.totalorder %s27, 0
      %p117 = por %p115, %p116
      %s119 = sadd.s32 %s118, 1
      %p122 = scmp.eq.s32.totalorder %s21, 1
      %p123 = scmp.ne.s32.totalorder %s118, %s120
      %p124 = scmp.eq.s32.totalorder %s21, 0
      %p125 = por %p123, %p124
      %p126 = scmp.ne.s32.totalorder %s118, %s120
      %p127 = scmp.eq.s32.totalorder %s26, 1
      %p128 = por %p126, %p127
      %p129 = scmp.ne.s32.totalorder %s120, %s121
      %p130 = scmp.eq.s32.totalorder %s26, 0
      %p131 = por %p129, %p130
      %p132 = scmp.ne.s32.totalorder %s120, %s121
      %p133 = scmp.eq.s32.totalorder %s27, 1
      %p134 = por %p132, %p133
      %p136 = scmp.ne.s32.totalorder %s121, %s135
      %p137 = scmp.eq.s32.totalorder %s27, 0
      %p138 = por %p136, %p137
      %s140 = sadd.s32 %s139, 1
      %p143 = scmp.eq.s32.totalorder %s21, 1
      %p144 = scmp.ne.s32.totalorder %s139, %s141
      %p145 = scmp.eq.s32.totalorder %s21, 0
      %p146 = por %p144, %p145
      %p147 = scmp.ne.s32.totalorder %s139, %s141
      %p148 = scmp.eq.s32.totalorder %s26, 1
      %p149 = por %p147, %p148
      %p150 = scmp.ne.s32.totalorder %s141, %s142
      %p151 = scmp.eq.s32.totalorder %s26, 0
      %p152 = por %p150, %p151
      %p153 = scmp.ne.s32.totalorder %s141, %s142
      %p154 = scmp.eq.s32.totalorder %s27, 1
      %p155 = por %p153, %p154
      %p157 = scmp.ne.s32.totalorder %s142, %s156
      %p158 = scmp.eq.s32.totalorder %s27, 0
      %p159 = por %p157, %p158
      %s161 = sadd.s32 %s160, 1
      %p164 = scmp.eq.s32.totalorder %s21, 1
      %p165 = scmp.ne.s32.totalorder %s160, %s162
      %p166 = scmp.eq.s32.totalorder %s21, 0
      %p167 = por %p165, %p166
      %p168 = scmp.ne.s32.totalorder %s160, %s162
      %p169 = scmp.eq.s32.totalorder %s26, 1
      %p170 = por %p168, %p169
      %p171 = scmp.ne.s32.totalorder %s162, %s163
      %p172 = scmp.eq.s32.totalorder %s26, 0
      %p173 = por %p171, %p172
      %p174 = scmp.ne.s32.totalorder %s162, %s163
      %p175 = scmp.eq.s32.totalorder %s27, 1
      %p176 = por %p174, %p175
      %p178 = scmp.ne.s32.totalorder %s163, %s177
      %p179 = scmp.eq.s32.totalorder %s27, 0
      %p180 = por %p178, %p179
      %s182 = sadd.s32 %s181, 1
      %p185 = scmp.eq.s32.totalorder %s21, 1
      %p186 = scmp.ne.s32.totalorder %s181, %s183
      %p187 = scmp.eq.s32.totalorder %s21, 0
      %p188 = por %p186, %p187
      %p189 = scmp.ne.s32.totalorder %s181, %s183
      %p190 = scmp.eq.s32.totalorder %s26, 1
      %p191 = por %p189, %p190
      %p192 = scmp.ne.s32.totalorder %s183, %s184
      %p193 = scmp.eq.s32.totalorder %s26, 0
      %p194 = por %p192, %p193
      %p195 = scmp.ne.s32.totalorder %s183, %s184
      %p196 = scmp.eq.s32.totalorder %s27, 1
      %p197 = por %p195, %p196
      %p199 = scmp.ne.s32.totalorder %s184, %s198
      %p200 = scmp.eq.s32.totalorder %s27, 0
      %p201 = por %p199, %p200
      %s203 = sadd.s32 %s202, 1
      %p206 = scmp.eq.s32.totalorder %s21, 1
      %p207 = scmp.ne.s32.totalorder %s202, %s204
      %p208 = scmp.eq.s32.totalorder %s21, 0
      %p209 = por %p207, %p208
      %p210 = scmp.ne.s32.totalorder %s202, %s204
      %p211 = scmp.eq.s32.totalorder %s26, 1
      %p212 = por %p210, %p211
      %p213 = scmp.ne.s32.totalorder %s204, %s205
      %p214 = scmp.eq.s32.totalorder %s26, 0
      %p215 = por %p213, %p214
      %p216 = scmp.ne.s32.totalorder %s204, %s205
      %p217 = scmp.eq.s32.totalorder %s27, 1
      %p218 = por %p216, %p217
      %p220 = scmp.ne.s32.totalorder %s205, %s219
      %p221 = scmp.eq.s32.totalorder %s27, 0
      %p222 = por %p220, %p221
      %s224 = sadd.s32 %s223, 1
      %p227 = scmp.eq.s32.totalorder %s21, 1
      %p228 = scmp.ne.s32.totalorder %s223, %s225
      %p229 = scmp.eq.s32.totalorder %s21, 0
      %p230 = por %p228, %p229
      %p231 = scmp.ne.s32.totalorder %s223, %s225
      %p232 = scmp.eq.s32.totalorder %s26, 1
      %p233 = por %p231, %p232
      %p234 = scmp.ne.s32.totalorder %s225, %s226
      %p235 = scmp.eq.s32.totalorder %s26, 0
      %p236 = por %p234, %p235
      %p237 = scmp.ne.s32.totalorder %s225, %s226
      %p238 = scmp.eq.s32.totalorder %s27, 1
      %p239 = por %p237, %p238
      %p241 = scmp.ne.s32.totalorder %s226, %s240
      %p242 = scmp.eq.s32.totalorder %s27, 0
      %p243 = por %p241, %p242
      %s245 = sadd.s32 %s244, 1
      %p248 = scmp.eq.s32.totalorder %s21, 1
      %p249 = scmp.ne.s32.totalorder %s244, %s246
      %p250 = scmp.eq.s32.totalorder %s21, 0
      %p251 = por %p249, %p250
      %p252 = scmp.ne.s32.totalorder %s244, %s246
      %p253 = scmp.eq.s32.totalorder %s26, 1
      %p254 = por %p252, %p253
      %p255 = scmp.ne.s32.totalorder %s246, %s247
      %p256 = scmp.eq.s32.totalorder %s26, 0
      %p257 = por %p255, %p256
      %p258 = scmp.ne.s32.totalorder %s246, %s247
      %p259 = scmp.eq.s32.totalorder %s27, 1
      %p260 = por %p258, %p259
      %p262 = scmp.ne.s32.totalorder %s247, %s261
      %p263 = scmp.eq.s32.totalorder %s27, 0
      %p264 = por %p262, %p263
      %s266 = sadd.s32 %s265, 1
      %p269 = scmp.eq.s32.totalorder %s21, 1
      %p270 = scmp.ne.s32.totalorder %s265, %s267
      %p271 = scmp.eq.s32.totalorder %s21, 0
      %p272 = por %p270, %p271
      %p273 = scmp.ne.s32.totalorder %s265, %s267
      %p274 = scmp.eq.s32.totalorder %s26, 1
      %p275 = por %p273, %p274
      %p276 = scmp.ne.s32.totalorder %s267, %s268
      %p277 = scmp.eq.s32.totalorder %s26, 0
      %p278 = por %p276, %p277
      %p279 = scmp.ne.s32.totalorder %s267, %s268
      %p280 = scmp.eq.s32.totalorder %s27, 1
      %p281 = por %p279, %p280
      %p283 = scmp.ne.s32.totalorder %s268, %s282
      %p284 = scmp.eq.s32.totalorder %s27, 0
      %p285 = por %p283, %p284
      %s287 = sadd.s32 %s286, 1
      %p290 = scmp.eq.s32.totalorder %s21, 1
      %p291 = scmp.ne.s32.totalorder %s286, %s288
      %p292 = scmp.eq.s32.totalorder %s21, 0
      %p293 = por %p291, %p292
      %p294 = scmp.ne.s32.totalorder %s286, %s288
      %p295 = scmp.eq.s32.totalorder %s26, 1
      %p296 = por %p294, %p295
      %p297 = scmp.ne.s32.totalorder %s288, %s289
      %p298 = scmp.eq.s32.totalorder %s26, 0
      %p299 = por %p297, %p298
      %p300 = scmp.ne.s32.totalorder %s288, %s289
      %p301 = scmp.eq.s32.totalorder %s27, 1
      %p302 = por %p300, %p301
      %p304 = scmp.ne.s32.totalorder %s289, %s303
      %p305 = scmp.eq.s32.totalorder %s27, 0
      %p306 = por %p304, %p305
      %s308 = sadd.s32 %s307, 1
      %p311 = scmp.eq.s32.totalorder %s21, 1
      %p312 = scmp.ne.s32.totalorder %s307, %s309
      %p313 = scmp.eq.s32.totalorder %s21, 0
      %p314 = por %p312, %p313
      %p315 = scmp.ne.s32.totalorder %s307, %s309
      %p316 = scmp.eq.s32.totalorder %s26, 1
      %p317 = por %p315, %p316
      %p318 = scmp.ne.s32.totalorder %s309, %s310
      %p319 = scmp.eq.s32.totalorder %s26, 0
      %p320 = por %p318, %p319
      %p321 = scmp.ne.s32.totalorder %s309, %s310
      %p322 = scmp.eq.s32.totalorder %s27, 1
      %p323 = por %p321, %p322
      %p325 = scmp.ne.s32.totalorder %s310, %s324
      %p326 = scmp.eq.s32.totalorder %s27, 0
      %p327 = por %p325, %p326
      %s328 = ssub.s32 %s21, %s28
      %p329 = scmp.eq.s32.totalorder %s328, 0
      %s331 = sadd.s32 %s330, 1
      %s332 = scalar_select %p329, %s330, %s331
      %p335 = pneg %p329
      %p336 = scmp.eq.s32.totalorder %s21, 1
      %p337 = por %p335, %p336
      %p338 = scmp.ne.s32.totalorder %s330, %s333
      %p339 = scmp.eq.s32.totalorder %s21, 0
      %p340 = por %p338, %p339
      %p341 = scmp.ne.s32.totalorder %s330, %s333
      %p342 = scmp.eq.s32.totalorder %s26, 1
      %p343 = por %p341, %p342
      %p344 = scmp.ne.s32.totalorder %s333, %s334
      %p345 = scmp.eq.s32.totalorder %s26, 0
      %p346 = por %p344, %p345
      %p347 = scmp.ne.s32.totalorder %s333, %s334
      %p348 = scmp.eq.s32.totalorder %s27, 1
      %p349 = por %p347, %p348
      %p351 = scmp.ne.s32.totalorder %s334, %s350
      %p352 = scmp.eq.s32.totalorder %s27, 0
      %p353 = por %p351, %p352
      %p354 = scmp.le.s32.totalorder 1, %s21
      %p355 = scmp.lt.s32.totalorder %s21, 3
      %p356 = pnand %p354, %p355
      %p357 = pneg %p356
      // Predicated region
      $region9: #{tpu_custom_call.1} parent=5 // pred_check
        _
      $region10: #{tpu_custom_call.1} parent=5 // pred_check_branch
        %359 = sbr.rel (%p356) target = $region12
      $region11: #{tpu_custom_call.1} parent=5 // pred_region
        %s360 = ssub.s32 %s21, 1
        // Predicated region
        $region13: #{tpu_custom_call.1} parent=11 // pred_check
          %p361 = pneg %p68
        $region14: #{tpu_custom_call.1} parent=11 // pred_check_branch
          %363 = sbr.rel (%p361) target = $region16
        $region15: #{tpu_custom_call.1} parent=11 // pred_region
          _
        $region16: #{tpu_custom_call.1} parent=11 // pred_fallthru
          _
        // Predicated region
        $region17: #{tpu_custom_call.1} parent=11 // pred_check
          %p364 = pneg %p89
        $region18: #{tpu_custom_call.1} parent=11 // pred_check_branch
          %366 = sbr.rel (%p364) target = $region20
        $region19: #{tpu_custom_call.1} parent=11 // pred_region
          _
        $region20: #{tpu_custom_call.1} parent=11 // pred_fallthru
          _
        // Predicated region
        $region21: #{tpu_custom_call.1} parent=11 // pred_check
          %p367 = pneg %p110
        $region22: #{tpu_custom_call.1} parent=11 // pred_check_branch
          %369 = sbr.rel (%p367) target = $region24
        $region23: #{tpu_custom_call.1} parent=11 // pred_region
          _
        $region24: #{tpu_custom_call.1} parent=11 // pred_fallthru
          _
        // Predicated region
        $region25: #{tpu_custom_call.1} parent=11 // pred_check
          %p370 = pneg %p131
        $region26: #{tpu_custom_call.1} parent=11 // pred_check_branch
          %372 = sbr.rel (%p370) target = $region28
        $region27: #{tpu_custom_call.1} parent=11 // pred_region
          _
        $region28: #{tpu_custom_call.1} parent=11 // pred_fallthru
          _
        // Predicated region
        $region29: #{tpu_custom_call.1} parent=11 // pred_check
          %p373 = pneg %p152
        $region30: #{tpu_custom_call.1} parent=11 // pred_check_branch
          %375 = sbr.rel (%p373) target = $region32
        $region31: #{tpu_custom_call.1} parent=11 // pred_region
          _
        $region32: #{tpu_custom_call.1} parent=11 // pred_fallthru
          _
        // Predicated region
        $region33: #{tpu_custom_call.1} parent=11 // pred_check
          %p376 = pneg %p173
        $region34: #{tpu_custom_call.1} parent=11 // pred_check_branch
          %378 = sbr.rel (%p376) target = $region36
        $region35: #{tpu_custom_call.1} parent=11 // pred_region
          _
        $region36: #{tpu_custom_call.1} parent=11 // pred_fallthru
          _
        // Predicated region
        $region37: #{tpu_custom_call.1} parent=11 // pred_check
          %p379 = pneg %p194
        $region38: #{tpu_custom_call.1} parent=11 // pred_check_branch
          %381 = sbr.rel (%p379) target = $region40
        $region39: #{tpu_custom_call.1} parent=11 // pred_region
          _
        $region40: #{tpu_custom_call.1} parent=11 // pred_fallthru
          _
        // Predicated region
        $region41: #{tpu_custom_call.1} parent=11 // pred_check
          %p382 = pneg %p215
        $region42: #{tpu_custom_call.1} parent=11 // pred_check_branch
          %384 = sbr.rel (%p382) target = $region44
        $region43: #{tpu_custom_call.1} parent=11 // pred_region
          _
        $region44: #{tpu_custom_call.1} parent=11 // pred_fallthru
          _
        // Predicated region
        $region45: #{tpu_custom_call.1} parent=11 // pred_check
          %p385 = pneg %p236
        $region46: #{tpu_custom_call.1} parent=11 // pred_check_branch
          %387 = sbr.rel (%p385) target = $region48
        $region47: #{tpu_custom_call.1} parent=11 // pred_region
          _
        $region48: #{tpu_custom_call.1} parent=11 // pred_fallthru
          _
        // Predicated region
        $region49: #{tpu_custom_call.1} parent=11 // pred_check
          %p388 = pneg %p257
        $region50: #{tpu_custom_call.1} parent=11 // pred_check_branch
          %390 = sbr.rel (%p388) target = $region52
        $region51: #{tpu_custom_call.1} parent=11 // pred_region
          _
        $region52: #{tpu_custom_call.1} parent=11 // pred_fallthru
          _
        // Predicated region
        $region53: #{tpu_custom_call.1} parent=11 // pred_check
          %p391 = pneg %p278
        $region54: #{tpu_custom_call.1} parent=11 // pred_check_branch
          %393 = sbr.rel (%p391) target = $region56
        $region55: #{tpu_custom_call.1} parent=11 // pred_region
          _
        $region56: #{tpu_custom_call.1} parent=11 // pred_fallthru
          _
        // Predicated region
        $region57: #{tpu_custom_call.1} parent=11 // pred_check
          %p394 = pneg %p299
        $region58: #{tpu_custom_call.1} parent=11 // pred_check_branch
          %396 = sbr.rel (%p394) target = $region60
        $region59: #{tpu_custom_call.1} parent=11 // pred_region
          _
        $region60: #{tpu_custom_call.1} parent=11 // pred_fallthru
          _
        // Predicated region
        $region61: #{tpu_custom_call.1} parent=11 // pred_check
          %p397 = pneg %p320
        $region62: #{tpu_custom_call.1} parent=11 // pred_check_branch
          %399 = sbr.rel (%p397) target = $region64
        $region63: #{tpu_custom_call.1} parent=11 // pred_region
          %401 = vsyncadd [#allocation3], 0
          %s403 = sshll.u32 %s13, 4
          %s404 = int_to_ptr.vmem [resolvable:$true] %s403
          %406 = dma.vmem_to_smem %s404, 16, [#allocation2], [#allocation3]
        $region64: #{tpu_custom_call.1} parent=11 // pred_fallthru
          _
      $region12: #{tpu_custom_call.1} parent=5 // pred_fallthru
        _
      %p407 = scmp.lt.s32.totalorder %s21, 2
      // Predicated region
      $region65: #{tpu_custom_call.1} parent=5 // pred_check
        %p408 = pneg %p407
      $region66: #{tpu_custom_call.1} parent=5 // pred_check_branch
        %410 = sbr.rel (%p408) target = $region68
      $region67: #{tpu_custom_call.1} parent=5 // pred_region
        // Predicated region
        $region69: #{tpu_custom_call.1} parent=67 // pred_check
          %p411 = pneg %p41
        $region70: #{tpu_custom_call.1} parent=67 // pred_check_branch
          %413 = sbr.rel (%p411) target = $region72
        $region71: #{tpu_custom_call.1} parent=67 // pred_region
          %s414 = smul.u32 8, %s21
          %p415 = scmp.lt.s32.totalorder %s414, 15
          %s416 = scalar_select %p415, %s414, 15
          %s417 = smul.addr %s416, 8
          %s418 = scalar_lea.vmem %s0, %s417
          %s419 = smul.u32 8, %s21
        $region72: #{tpu_custom_call.1} parent=67 // pred_fallthru
          _
      $region68: #{tpu_custom_call.1} parent=5 // pred_fallthru
        _
      %p420 = scmp.le.s32.totalorder 1, %s21
      %p421 = scmp.lt.s32.totalorder %s21, 3
      %p422 = pnand %p420, %p421
      %p423 = pneg %p422
      // Predicated region
      $region73: #{tpu_custom_call.1} parent=5 // pred_check
        _
      $region74: #{tpu_custom_call.1} parent=5 // pred_check_branch
        %425 = sbr.rel (%p422) target = $region76
      $region75: #{tpu_custom_call.1} parent=5 // pred_region
        %s426 = ssub.s32 %s21, 1
        // Predicated region
        $region77: #{tpu_custom_call.1} parent=75 // pred_check
          %p427 = pneg %p320
        $region78: #{tpu_custom_call.1} parent=75 // pred_check_branch
          %429 = sbr.rel (%p427) target = $region80
        $region79: #{tpu_custom_call.1} parent=75 // pred_region
          %431 = dma.done [#allocation3], 16
        $region80: #{tpu_custom_call.1} parent=75 // pred_fallthru
          _
        %432 = sfence
        %s433 = smul.u32 8, %s26
        %p434 = scmp.lt.s32.totalorder %s433, 15
        %s435 = scalar_select %p434, %s433, 15
        %s436 = smul.addr %s435, 8
        %s437 = scalar_lea.vmem %s0, %s436
        %p438 = pneg %p47
        %p439 = pneg %p44
        %p440 = pneg %p68
        %p441 = pneg %p65
        %p442 = pneg %p89
        %p443 = pneg %p86
        %p444 = pneg %p110
        %p445 = pneg %p107
        %p446 = pneg %p131
        %p447 = pneg %p128
        %p448 = pneg %p152
        %p449 = pneg %p149
        %p450 = pneg %p173
        %p451 = pneg %p170
        %p452 = pneg %p194
        %p453 = pneg %p191
        %p454 = pneg %p215
        %p455 = pneg %p212
        %p456 = pneg %p236
        %p457 = pneg %p233
        %p458 = pneg %p257
        %p459 = pneg %p254
        %p460 = pneg %p278
        %p461 = pneg %p275
        %p462 = pneg %p299
        %p463 = pneg %p296
        %p464 = pneg %p320
        %p465 = pneg %p317
        %p466 = pneg %p346
        %p467 = pneg %p343
        %s468 = smul.u32 8, %s26
        %p469 = scmp.lt.s32.totalorder %s468, 15
        %s470 = scalar_select %p469, %s468, 15
        %s471 = smul.addr %s470, 8
        %s472 = scalar_lea.vmem %s14, %s471
        %s473 = smul.u32 8, %s26
        %p474 = scmp.lt.s32.totalorder %s473, 15
        %s475 = scalar_select %p474, %s473, 15
        %s476 = smul.addr %s475, 8
        %s477 = scalar_lea.vmem %s0, %s476
        %s478 = smul.u32 8, %s26
        %s479 = smul.u32 8, %s26
        %p480 = scmp.lt.s32.totalorder %s479, 15
        %s481 = scalar_select %p480, %s479, 15
        %s482 = smul.addr %s481, 8
        %s483 = scalar_lea.vmem %s14, %s482
        %s484 = smul.u32 8, %s26
        %v486 = vld [vmem:[%s477] sm:$0xff]
        %v487 = vld [vmem:[%s477 + $0x8] sm:$0xff]
        %v488 = vld [vmem:[%s477 + $0x10] sm:$0xff]
        %v489 = vld [vmem:[%s477 + $0x18] sm:$0xff]
        %v490 = vld [vmem:[%s477 + $0x20] sm:$0xff]
        %v491 = vld [vmem:[%s477 + $0x28] sm:$0xff]
        %v492 = vld [vmem:[%s477 + $0x30] sm:$0xff]
        %v493 = vld [vmem:[%s477 + $0x38] sm:$0xff]
        %v494 = vpack.c.bf16 %v487, %v486
        %v495 = vpack.c.bf16 %v489, %v488
        %v496 = vpack.c.bf16 %v491, %v490
        %v497 = vpack.c.bf16 %v493, %v492
        %v498 = vld [vmem:[%s1] sm:$0xf]
        %v499 = vld [vmem:[%s1 + $0x4] sm:$0xf]
        %v500 = vld [vmem:[%s1 + $0x8] sm:$0xf]
        %v501 = vld [vmem:[%s1 + $0xc] sm:$0xf]
        %v506 = vunpack.c.l.b16 %v498
        %v507 = vunpack.c.l.b16 %v499
        %v508 = vunpack.c.l.b16 %v500
        %v509 = vunpack.c.l.b16 %v501
        %v510 = vpack.c.b16 %v507, %v506
        %v511 = vpack.c.b16 %v509, %v508
        %vm514 = vcmask 261120
        %v516 = vsel %vm514, %v494, 0
        %v519 = vsel %vm514, %v495, 0
        %v522 = vsel %vm514, %v496, 0
        %v525 = vsel %vm514, %v497, 0
        %527 = vmatpush.bf16.msra.mxu0 0
        %528 = vmatpush.bf16.msra.mxu0 0
        %529 = vmatpush.bf16.msra.mxu0 0
        %530 = vmatpush.bf16.msra.mxu0 0
        %531 = vmatpush.bf16.msra.mxu0 0
        %532 = vmatpush.bf16.msra.mxu0 0
        %533 = vmatpush.bf16.msra.mxu0 %v511
        %534 = vmatpush.bf16.msra.mxu0 %v510
        %535 = vmatmul.bf16.gmra.mxu0 %v516
        %v536 = vpop.f32.mrf.mxu0
        %v537 = vadd.f32 0.0, %v536
        %v538 = vpop.f32.mrf.mxu0
        %v539 = vadd.f32 0.0, %v538
        %540 = vmatmul.bf16.gmra.mxu0 %v519
        %v541 = vpop.f32.mrf.mxu0
        %v542 = vadd.f32 0.0, %v541
        %v543 = vpop.f32.mrf.mxu0
        %v544 = vadd.f32 0.0, %v543
        %545 = vmatmul.bf16.gmra.mxu0 %v522
        %v546 = vpop.f32.mrf.mxu0
        %v547 = vadd.f32 0.0, %v546
        %v548 = vpop.f32.mrf.mxu0
        %v549 = vadd.f32 0.0, %v548
        %550 = vmatmul.bf16.gmra.mxu0 %v525
        %v551 = vpop.f32.mrf.mxu0
        %v552 = vadd.f32 0.0, %v551
        %v553 = vpop.f32.mrf.mxu0
        %v554 = vadd.f32 0.0, %v553
        %555 = vdwg.mxu0
        %v556 = vld [vmem:[%s4] sm:$0x1]
        %v558 = vperm.slane %v556, 0
        %v560 = vmul.f32 %v537, %v558
        %v561 = vmul.f32 %v539, %v558
        %v562 = vmul.f32 %v542, %v558
        %v563 = vmul.f32 %v544, %v558
        %v564 = vmul.f32 %v547, %v558
        %v565 = vmul.f32 %v549, %v558
        %v566 = vmul.f32 %v552, %v558
        %v567 = vmul.f32 %v554, %v558
        %v568 = vld [vmem:[%s5] sm:$0x1]
        %v570 = vperm.slane %v568, 0
        %v572 = vadd.f32 %v560, %v570
        %v573 = vadd.f32 %v561, %v570
        %v574 = vadd.f32 %v562, %v570
        %v575 = vadd.f32 %v563, %v570
        %v576 = vadd.f32 %v564, %v570
        %v577 = vadd.f32 %v565, %v570
        %v578 = vadd.f32 %v566, %v570
        %v579 = vadd.f32 %v567, %v570
        %v580 = vmax.f32 %v572, 0.0
        %v581 = vmax.f32 %v573, 0.0
        %v582 = vmax.f32 %v574, 0.0
        %v583 = vmax.f32 %v575, 0.0
        %v584 = vmax.f32 %v576, 0.0
        %v585 = vmax.f32 %v577, 0.0
        %v586 = vmax.f32 %v578, 0.0
        %v587 = vmax.f32 %v579, 0.0
        %v597 = vrot.slane 0.0, 7
        %v598 = vrot.slane %v580, 7
        %v599 = vrot.slane %v581, 7
        %v600 = vrot.slane %v582, 7
        %v601 = vrot.slane %v583, 7
        %v602 = vrot.slane %v584, 7
        %v603 = vrot.slane %v585, 7
        %v604 = vrot.slane %v586, 7
        %v605 = vrot.slane %v587, 7
        %vm615 = vcmask 1040384
        %v616 = vsel %vm615, 0.0, %v597
        %v617 = vsel %vm615, 0.0, %v598
        %v618 = vsel %vm615, 0.0, %v599
        %v619 = vsel %vm615, 0.0, %v600
        %v620 = vsel %vm615, 0.0, %v601
        %v621 = vsel %vm615, 0.0, %v602
        %v622 = vsel %vm615, 0.0, %v603
        %v623 = vsel %vm615, 0.0, %v604
        %v624 = vsel %vm615, 0.0, %v605
        %v625 = vsel %vm615, %v597, 0.0
        %v626 = vsel %vm615, %v598, 0.0
        %v627 = vsel %vm615, %v599, 0.0
        %v628 = vsel %vm615, %v600, 0.0
        %v629 = vsel %vm615, %v601, 0.0
        %v630 = vsel %vm615, %v602, 0.0
        %v631 = vsel %vm615, %v603, 0.0
        %v632 = vsel %vm615, %v604, 0.0
        %v633 = vsel %vm615, %v605, 0.0
        %vm650 = vcmask 1046528
        %v651 = vrot.slane %v616, 1
        %v652 = vrot.slane %v625, 1
        %v653 = vsel %vm650, %v651, %v652
        %v654 = vrot.slane %v617, 1
        %v655 = vrot.slane %v626, 1
        %v656 = vsel %vm650, %v654, %v655
        %v657 = vrot.slane %v618, 1
        %v658 = vrot.slane %v627, 1
        %v659 = vsel %vm650, %v657, %v658
        %v660 = vrot.slane %v619, 1
        %v661 = vrot.slane %v628, 1
        %v662 = vsel %vm650, %v660, %v661
        %v663 = vrot.slane %v620, 1
        %v664 = vrot.slane %v629, 1
        %v665 = vsel %vm650, %v663, %v664
        %v666 = vrot.slane %v621, 1
        %v667 = vrot.slane %v630, 1
        %v668 = vsel %vm650, %v666, %v667
        %v669 = vrot.slane %v622, 1
        %v670 = vrot.slane %v631, 1
        %v671 = vsel %vm650, %v669, %v670
        %v672 = vrot.slane %v623, 1
        %v673 = vrot.slane %v632, 1
        %v674 = vsel %vm650, %v672, %v673
        %vm675 = vcmask 1045504
        %v676 = vrot.slane %v616, 2
        %v677 = vrot.slane %v625, 2
        %v678 = vsel %vm675, %v676, %v677
        %v679 = vrot.slane %v617, 2
        %v680 = vrot.slane %v626, 2
        %v681 = vsel %vm675, %v679, %v680
        %v682 = vrot.slane %v618, 2
        %v683 = vrot.slane %v627, 2
        %v684 = vsel %vm675, %v682, %v683
        %v685 = vrot.slane %v619, 2
        %v686 = vrot.slane %v628, 2
        %v687 = vsel %vm675, %v685, %v686
        %v688 = vrot.slane %v620, 2
        %v689 = vrot.slane %v629, 2
        %v690 = vsel %vm675, %v688, %v689
        %v691 = vrot.slane %v621, 2
        %v692 = vrot.slane %v630, 2
        %v693 = vsel %vm675, %v691, %v692
        %v694 = vrot.slane %v622, 2
        %v695 = vrot.slane %v631, 2
        %v696 = vsel %vm675, %v694, %v695
        %v697 = vrot.slane %v623, 2
        %v698 = vrot.slane %v632, 2
        %v699 = vsel %vm675, %v697, %v698
        %v702 = vrot.slane %v624, 1
        %v703 = vrot.slane %v633, 1
        %v704 = vsel %vm650, %v702, %v703
        %v705 = vrot.slane %v624, 2
        %v706 = vrot.slane %v633, 2
        %v707 = vsel %vm675, %v705, %v706
        %708 = vrot.lane.b32.xlu0 %v653, 8
        %v709 = vpop.permute.xlu0 %708
        %710 = vrot.lane.b32.xlu0 %v656, 8
        %v711 = vpop.permute.xlu0 %710
        %712 = vrot.lane.b32.xlu0 %v659, 8
        %v713 = vpop.permute.xlu0 %712
        %714 = vrot.lane.b32.xlu0 %v662, 8
        %v715 = vpop.permute.xlu0 %714
        %716 = vrot.lane.b32.xlu0 %v665, 8
        %v717 = vpop.permute.xlu0 %716
        %718 = vrot.lane.b32.xlu0 %v668, 8
        %v719 = vpop.permute.xlu0 %718
        %720 = vrot.lane.b32.xlu0 %v671, 8
        %v721 = vpop.permute.xlu0 %720
        %722 = vrot.lane.b32.xlu0 %v674, 8
        %v723 = vpop.permute.xlu0 %722
        %732 = vrot.lane.b32.xlu0 %v678, 16
        %v733 = vpop.permute.xlu0 %732
        %734 = vrot.lane.b32.xlu0 %v681, 16
        %v735 = vpop.permute.xlu0 %734
        %736 = vrot.lane.b32.xlu0 %v684, 16
        %v737 = vpop.permute.xlu0 %736
        %738 = vrot.lane.b32.xlu0 %v687, 16
        %v739 = vpop.permute.xlu0 %738
        %740 = vrot.lane.b32.xlu0 %v690, 16
        %v741 = vpop.permute.xlu0 %740
        %742 = vrot.lane.b32.xlu0 %v693, 16
        %v743 = vpop.permute.xlu0 %742
        %744 = vrot.lane.b32.xlu0 %v696, 16
        %v745 = vpop.permute.xlu0 %744
        %746 = vrot.lane.b32.xlu0 %v699, 16
        %v747 = vpop.permute.xlu0 %746
        %756 = vrot.lane.b32.xlu0 %v617, 24
        %v757 = vpop.permute.xlu0 %756
        %758 = vrot.lane.b32.xlu0 %v618, 24
        %v759 = vpop.permute.xlu0 %758
        %760 = vrot.lane.b32.xlu0 %v619, 24
        %v761 = vpop.permute.xlu0 %760
        %762 = vrot.lane.b32.xlu0 %v620, 24
        %v763 = vpop.permute.xlu0 %762
        %764 = vrot.lane.b32.xlu0 %v621, 24
        %v765 = vpop.permute.xlu0 %764
        %766 = vrot.lane.b32.xlu0 %v622, 24
        %v767 = vpop.permute.xlu0 %766
        %768 = vrot.lane.b32.xlu0 %v623, 24
        %v769 = vpop.permute.xlu0 %768
        %770 = vrot.lane.b32.xlu0 %v624, 24
        %v771 = vpop.permute.xlu0 %770
        %780 = vrot.lane.b32.xlu0 %v656, 32
        %v781 = vpop.permute.xlu0 %780
        %782 = vrot.lane.b32.xlu0 %v659, 32
        %v783 = vpop.permute.xlu0 %782
        %784 = vrot.lane.b32.xlu0 %v662, 32
        %v785 = vpop.permute.xlu0 %784
        %786 = vrot.lane.b32.xlu0 %v665, 32
        %v787 = vpop.permute.xlu0 %786
        %788 = vrot.lane.b32.xlu0 %v668, 32
        %v789 = vpop.permute.xlu0 %788
        %790 = vrot.lane.b32.xlu0 %v671, 32
        %v791 = vpop.permute.xlu0 %790
        %792 = vrot.lane.b32.xlu0 %v674, 32
        %v793 = vpop.permute.xlu0 %792
        %794 = vrot.lane.b32.xlu0 %v704, 32
        %v795 = vpop.permute.xlu0 %794
        %804 = vrot.lane.b32.xlu0 %v681, 40
        %v805 = vpop.permute.xlu0 %804
        %806 = vrot.lane.b32.xlu0 %v684, 40
        %v807 = vpop.permute.xlu0 %806
        %808 = vrot.lane.b32.xlu0 %v687, 40
        %v809 = vpop.permute.xlu0 %808
        %810 = vrot.lane.b32.xlu0 %v690, 40
        %v811 = vpop.permute.xlu0 %810
        %812 = vrot.lane.b32.xlu0 %v693, 40
        %v813 = vpop.permute.xlu0 %812
        %814 = vrot.lane.b32.xlu0 %v696, 40
        %v815 = vpop.permute.xlu0 %814
        %816 = vrot.lane.b32.xlu0 %v699, 40
        %v817 = vpop.permute.xlu0 %816
        %818 = vrot.lane.b32.xlu0 %v707, 40
        %v819 = vpop.permute.xlu0 %818
        %828 = vrot.lane.b32.xlu0 %v618, 48
        %v829 = vpop.permute.xlu0 %828
        %830 = vrot.lane.b32.xlu0 %v619, 48
        %v831 = vpop.permute.xlu0 %830
        %832 = vrot.lane.b32.xlu0 %v620, 48
        %v833 = vpop.permute.xlu0 %832
        %834 = vrot.lane.b32.xlu0 %v621, 48
        %v835 = vpop.permute.xlu0 %834
        %836 = vrot.lane.b32.xlu0 %v622, 48
        %v837 = vpop.permute.xlu0 %836
        %838 = vrot.lane.b32.xlu0 %v623, 48
        %v839 = vpop.permute.xlu0 %838
        %840 = vrot.lane.b32.xlu0 %v624, 48
        %v841 = vpop.permute.xlu0 %840
        %842 = vrot.lane.b32.xlu0 %v616, 48
        %v843 = vpop.permute.xlu0 %842
        %852 = vrot.lane.b32.xlu0 %v659, 56
        %v853 = vpop.permute.xlu0 %852
        %854 = vrot.lane.b32.xlu0 %v662, 56
        %v855 = vpop.permute.xlu0 %854
        %856 = vrot.lane.b32.xlu0 %v665, 56
        %v857 = vpop.permute.xlu0 %856
        %858 = vrot.lane.b32.xlu0 %v668, 56
        %v859 = vpop.permute.xlu0 %858
        %860 = vrot.lane.b32.xlu0 %v671, 56
        %v861 = vpop.permute.xlu0 %860
        %862 = vrot.lane.b32.xlu0 %v674, 56
        %v863 = vpop.permute.xlu0 %862
        %864 = vrot.lane.b32.xlu0 %v704, 56
        %v865 = vpop.permute.xlu0 %864
        %866 = vrot.lane.b32.xlu0 %v653, 56
        %v867 = vpop.permute.xlu0 %866
        %876 = vrot.lane.b32.xlu0 %v684, 64
        %v877 = vpop.permute.xlu0 %876
        %878 = vrot.lane.b32.xlu0 %v687, 64
        %v879 = vpop.permute.xlu0 %878
        %880 = vrot.lane.b32.xlu0 %v690, 64
        %v881 = vpop.permute.xlu0 %880
        %882 = vrot.lane.b32.xlu0 %v693, 64
        %v883 = vpop.permute.xlu0 %882
        %884 = vrot.lane.b32.xlu0 %v696, 64
        %v885 = vpop.permute.xlu0 %884
        %886 = vrot.lane.b32.xlu0 %v699, 64
        %v887 = vpop.permute.xlu0 %886
        %888 = vrot.lane.b32.xlu0 %v707, 64
        %v889 = vpop.permute.xlu0 %888
        %890 = vrot.lane.b32.xlu0 %v678, 64
        %v891 = vpop.permute.xlu0 %890
        %vm900 = vcmask 64512
        %v901 = vsel %vm900, %v616, %v709
        %v902 = vsel %vm900, %v617, %v711
        %v903 = vsel %vm900, %v618, %v713
        %v904 = vsel %vm900, %v619, %v715
        %v905 = vsel %vm900, %v620, %v717
        %v906 = vsel %vm900, %v621, %v719
        %v907 = vsel %vm900, %v622, %v721
        %v908 = vsel %vm900, %v623, %v723
        %vm909 = vcmask 130048
        %v910 = vsel %vm909, %v901, %v733
        %v911 = vsel %vm909, %v902, %v735
        %v912 = vsel %vm909, %v903, %v737
        %v913 = vsel %vm909, %v904, %v739
        %v914 = vsel %vm909, %v905, %v741
        %v915 = vsel %vm909, %v906, %v743
        %v916 = vsel %vm909, %v907, %v745
        %v917 = vsel %vm909, %v908, %v747
        %vm918 = vcmask 195584
        %v919 = vsel %vm918, %v910, %v757
        %v920 = vsel %vm918, %v911, %v759
        %v921 = vsel %vm918, %v912, %v761
        %v922 = vsel %vm918, %v913, %v763
        %v923 = vsel %vm918, %v914, %v765
        %v924 = vsel %vm918, %v915, %v767
        %v925 = vsel %vm918, %v916, %v769
        %v926 = vsel %vm918, %v917, %v771
        %v927 = vsel %vm514, %v919, %v781
        %v928 = vsel %vm514, %v920, %v783
        %v929 = vsel %vm514, %v921, %v785
        %v930 = vsel %vm514, %v922, %v787
        %v931 = vsel %vm514, %v923, %v789
        %v932 = vsel %vm514, %v924, %v791
        %v933 = vsel %vm514, %v925, %v793
        %v934 = vsel %vm514, %v926, %v795
        %vm935 = vcmask 326656
        %v936 = vsel %vm935, %v927, %v805
        %v937 = vsel %vm935, %v928, %v807
        %v938 = vsel %vm935, %v929, %v809
        %v939 = vsel %vm935, %v930, %v811
        %v940 = vsel %vm935, %v931, %v813
        %v941 = vsel %vm935, %v932, %v815
        %v942 = vsel %vm935, %v933, %v817
        %v943 = vsel %vm935, %v934, %v819
        %vm944 = vcmask 392192
        %v945 = vsel %vm944, %v936, %v829
        %v946 = vsel %vm944, %v937, %v831
        %v947 = vsel %vm944, %v938, %v833
        %v948 = vsel %vm944, %v939, %v835
        %v949 = vsel %vm944, %v940, %v837
        %v950 = vsel %vm944, %v941, %v839
        %v951 = vsel %vm944, %v942, %v841
        %v952 = vsel %vm944, %v943, %v843
        %vm953 = vcmask 457728
        %v954 = vsel %vm953, %v945, %v853
        %v955 = vsel %vm953, %v946, %v855
        %v956 = vsel %vm953, %v947, %v857
        %v957 = vsel %vm953, %v948, %v859
        %v958 = vsel %vm953, %v949, %v861
        %v959 = vsel %vm953, %v950, %v863
        %v960 = vsel %vm953, %v951, %v865
        %v961 = vsel %vm953, %v952, %v867
        %vm962 = vcmask 523264
        %v963 = vsel %vm962, %v954, %v877
        %v964 = vsel %vm962, %v955, %v879
        %v965 = vsel %vm962, %v956, %v881
        %v966 = vsel %vm962, %v957, %v883
        %v967 = vsel %vm962, %v958, %v885
        %v968 = vsel %vm962, %v959, %v887
        %v969 = vsel %vm962, %v960, %v889
        %v970 = vsel %vm962, %v961, %v891
        %v971 = vpack.c.bf16 %v964, %v963
        %v972 = vpack.c.bf16 %v966, %v965
        %v973 = vpack.c.bf16 %v968, %v967
        %v974 = vpack.c.bf16 %v970, %v969
        %v975 = vld [vmem:[%s2] sm:$0xf]
        %v976 = vld [vmem:[%s2 + $0x4] sm:$0xf]
        %v977 = vld [vmem:[%s2 + $0x8] sm:$0xf]
        %v978 = vld [vmem:[%s2 + $0xc] sm:$0xf]
        %v979 = vld [vmem:[%s2 + $0x10] sm:$0xf]
        %v980 = vld [vmem:[%s2 + $0x14] sm:$0xf]
        %v981 = vld [vmem:[%s2 + $0x18] sm:$0xf]
        %v982 = vld [vmem:[%s2 + $0x1c] sm:$0xf]
        %v983 = vld [vmem:[%s2 + $0x20] sm:$0xf]
        %v993 = vunpack.c.l.b16 %v975
        %v994 = vunpack.c.l.b16 %v976
        %v995 = vunpack.c.l.b16 %v977
        %v996 = vunpack.c.l.b16 %v978
        %v997 = vunpack.c.l.b16 %v979
        %v998 = vunpack.c.l.b16 %v980
        %v999 = vunpack.c.l.b16 %v981
        %v1000 = vunpack.c.l.b16 %v982
        %v1001 = vunpack.c.l.b16 %v983
        %v1002 = vpack.c.b16 %v994, %v993
        %v1003 = vpack.c.b16 %v996, %v995
        %v1004 = vpack.c.b16 %v998, %v997
        %v1005 = vpack.c.b16 %v1000, %v999
        %v1006 = vpack.c.b16 %v1001, %v1001
        %vm1011 = vcmask 588800
        %v1013 = vsel %vm1011, %v971, 0
        %v1016 = vsel %vm1011, %v972, 0
        %v1019 = vsel %vm1011, %v973, 0
        %v1022 = vsel %vm1011, %v974, 0
        %vm1024 = vcmask 1043456
        %v1026 = vsel %vm1024, %v1006, 0
        %1028 = vmatpush.bf16.msra.mxu0 0
        %1029 = vmatpush.bf16.msra.mxu0 0
        %1030 = vmatpush.bf16.msra.mxu0 0
        %1031 = vmatpush.bf16.msra.mxu0 %v1026
        %1032 = vmatpush.bf16.msra.mxu0 %v1005
        %1033 = vmatpush.bf16.msra.mxu0 %v1004
        %1034 = vmatpush.bf16.msra.mxu0 %v1003
        %1035 = vmatpush.bf16.msra.mxu0 %v1002
        %1036 = vmatmul.bf16.gmra.mxu0 %v1013
        %v1037 = vpop.f32.mrf.mxu0
        %v1038 = vadd.f32 0.0, %v1037
        %v1039 = vpop.f32.mrf.mxu0
        %v1040 = vadd.f32 0.0, %v1039
        %1041 = vmatmul.bf16.gmra.mxu0 %v1016
        %v1042 = vpop.f32.mrf.mxu0
        %v1043 = vadd.f32 0.0, %v1042
        %v1044 = vpop.f32.mrf.mxu0
        %v1045 = vadd.f32 0.0, %v1044
        %1046 = vmatmul.bf16.gmra.mxu0 %v1019
        %v1047 = vpop.f32.mrf.mxu0
        %v1048 = vadd.f32 0.0, %v1047
        %v1049 = vpop.f32.mrf.mxu0
        %v1050 = vadd.f32 0.0, %v1049
        %1051 = vmatmul.bf16.gmra.mxu0 %v1022
        %v1052 = vpop.f32.mrf.mxu0
        %v1053 = vadd.f32 0.0, %v1052
        %v1054 = vpop.f32.mrf.mxu0
        %v1055 = vadd.f32 0.0, %v1054
        %1056 = vdwg.mxu0
        %v1057 = vld [vmem:[%s6] sm:$0x1]
        %v1059 = vperm.slane %v1057, 0
        %v1061 = vmul.f32 %v1038, %v1059
        %v1062 = vmul.f32 %v1040, %v1059
        %v1063 = vmul.f32 %v1043, %v1059
        %v1064 = vmul.f32 %v1045, %v1059
        %v1065 = vmul.f32 %v1048, %v1059
        %v1066 = vmul.f32 %v1050, %v1059
        %v1067 = vmul.f32 %v1053, %v1059
        %v1068 = vmul.f32 %v1055, %v1059
        %v1069 = vld [vmem:[%s7] sm:$0x1]
        %v1071 = vperm.slane %v1069, 0
        %v1073 = vadd.f32 %v1061, %v1071
        %v1074 = vadd.f32 %v1062, %v1071
        %v1075 = vadd.f32 %v1063, %v1071
        %v1076 = vadd.f32 %v1064, %v1071
        %v1077 = vadd.f32 %v1065, %v1071
        %v1078 = vadd.f32 %v1066, %v1071
        %v1079 = vadd.f32 %v1067, %v1071
        %v1080 = vadd.f32 %v1068, %v1071
        %v1081 = vmax.f32 %v1073, 0.0
        %v1082 = vmax.f32 %v1074, 0.0
        %v1083 = vmax.f32 %v1075, 0.0
        %v1084 = vmax.f32 %v1076, 0.0
        %v1085 = vmax.f32 %v1077, 0.0
        %v1086 = vmax.f32 %v1078, 0.0
        %v1087 = vmax.f32 %v1079, 0.0
        %v1088 = vmax.f32 %v1080, 0.0
        %v1089 = vpack.c.bf16 %v1082, %v1081
        %v1090 = vpack.c.bf16 %v1084, %v1083
        %v1091 = vpack.c.bf16 %v1086, %v1085
        %v1092 = vpack.c.bf16 %v1088, %v1087
        %v1093 = vld [vmem:[%s3] sm:$0xf]
        %v1095 = vsel %vm900, %v1089, 0
        %v1098 = vsel %vm900, %v1090, 0
        %v1101 = vsel %vm900, %v1091, 0
        %v1104 = vsel %vm900, %v1092, 0
        %v1107 = vsel %vm1024, %v1093, 0
        %1109 = vmatpush.bf16.msra.mxu0 0
        %1110 = vmatpush.bf16.msra.mxu0 0
        %1111 = vmatpush.bf16.msra.mxu0 0
        %1112 = vmatpush.bf16.msra.mxu0 0
        %1113 = vmatpush.bf16.msra.mxu0 0
        %1114 = vmatpush.bf16.msra.mxu0 0
        %1115 = vmatpush.bf16.msra.mxu0 0
        %1116 = vmatpush.bf16.msra.mxu0 %v1107
        %1117 = vmatmul.bf16.gmra.mxu0 %v1095
        %v1118 = vpop.f32.mrf.mxu0
        %v1119 = vadd.f32 0.0, %v1118
        %v1120 = vpop.f32.mrf.mxu0
        %v1121 = vadd.f32 0.0, %v1120
        %1122 = vmatmul.bf16.gmra.mxu0 %v1098
        %v1123 = vpop.f32.mrf.mxu0
        %v1124 = vadd.f32 0.0, %v1123
        %v1125 = vpop.f32.mrf.mxu0
        %v1126 = vadd.f32 0.0, %v1125
        %1127 = vmatmul.bf16.gmra.mxu0 %v1101
        %v1128 = vpop.f32.mrf.mxu0
        %v1129 = vadd.f32 0.0, %v1128
        %v1130 = vpop.f32.mrf.mxu0
        %v1131 = vadd.f32 0.0, %v1130
        %1132 = vmatmul.bf16.gmra.mxu0 %v1104
        %v1133 = vpop.f32.mrf.mxu0
        %v1134 = vadd.f32 0.0, %v1133
        %v1135 = vpop.f32.mrf.mxu0
        %v1136 = vadd.f32 0.0, %v1135
        %1137 = vdwg.mxu0
        %v1138 = vld [vmem:[%s8] sm:$0x1]
        %v1140 = vperm.slane %v1138, 0
        %v1142 = vmul.f32 %v1119, %v1140
        %v1143 = vmul.f32 %v1121, %v1140
        %v1144 = vmul.f32 %v1124, %v1140
        %v1145 = vmul.f32 %v1126, %v1140
        %v1146 = vmul.f32 %v1129, %v1140
        %v1147 = vmul.f32 %v1131, %v1140
        %v1148 = vmul.f32 %v1134, %v1140
        %v1149 = vmul.f32 %v1136, %v1140
        %v1150 = vld [vmem:[%s9] sm:$0x1]
        %v1152 = vperm.slane %v1150, 0
        %v1154 = vadd.f32 %v1142, %v1152
        %v1155 = vadd.f32 %v1143, %v1152
        %v1156 = vadd.f32 %v1144, %v1152
        %v1157 = vadd.f32 %v1145, %v1152
        %v1158 = vadd.f32 %v1146, %v1152
        %v1159 = vadd.f32 %v1147, %v1152
        %v1160 = vadd.f32 %v1148, %v1152
        %v1161 = vadd.f32 %v1149, %v1152
        %v1162 = vsel %vm514, %v1154, -inf
        %1163 = vmax.xlane.f32.xlu0 %v1162
        %v1164 = vpop.xlane.xlu0 %1163
        %v1165 = vsel %vm514, %v1155, -inf
        %1166 = vmax.xlane.f32.xlu0 %v1165
        %v1167 = vpop.xlane.xlu0 %1166
        %v1168 = vsel %vm514, %v1156, -inf
        %1169 = vmax.xlane.f32.xlu0 %v1168
        %v1170 = vpop.xlane.xlu0 %1169
        %v1171 = vsel %vm514, %v1157, -inf
        %1172 = vmax.xlane.f32.xlu0 %v1171
        %v1173 = vpop.xlane.xlu0 %1172
        %v1174 = vsel %vm514, %v1158, -inf
        %1175 = vmax.xlane.f32.xlu0 %v1174
        %v1176 = vpop.xlane.xlu0 %1175
        %v1177 = vsel %vm514, %v1159, -inf
        %1178 = vmax.xlane.f32.xlu0 %v1177
        %v1179 = vpop.xlane.xlu0 %1178
        %v1180 = vsel %vm514, %v1160, -inf
        %1181 = vmax.xlane.f32.xlu0 %v1180
        %v1182 = vpop.xlane.xlu0 %1181
        %v1183 = vsel %vm514, %v1161, -inf
        %1184 = vmax.xlane.f32.xlu0 %v1183
        %v1185 = vpop.xlane.xlu0 %1184
        %v1186 = vsel %vm514, %v1154, 0.0
        %1187 = vadd.xlane.f32.xlu0 %v1186
        %v1188 = vpop.xlane.xlu0 %1187
        %v1189 = vsel %vm514, %v1155, 0.0
        %1190 = vadd.xlane.f32.xlu0 %v1189
        %v1191 = vpop.xlane.xlu0 %1190
        %v1192 = vsel %vm514, %v1156, 0.0
        %1193 = vadd.xlane.f32.xlu0 %v1192
        %v1194 = vpop.xlane.xlu0 %1193
        %v1195 = vsel %vm514, %v1157, 0.0
        %1196 = vadd.xlane.f32.xlu0 %v1195
        %v1197 = vpop.xlane.xlu0 %1196
        %v1198 = vsel %vm514, %v1158, 0.0
        %1199 = vadd.xlane.f32.xlu0 %v1198
        %v1200 = vpop.xlane.xlu0 %1199
        %v1201 = vsel %vm514, %v1159, 0.0
        %1202 = vadd.xlane.f32.xlu0 %v1201
        %v1203 = vpop.xlane.xlu0 %1202
        %v1204 = vsel %vm514, %v1160, 0.0
        %1205 = vadd.xlane.f32.xlu0 %v1204
        %v1206 = vpop.xlane.xlu0 %1205
        %v1207 = vsel %vm514, %v1161, 0.0
        %1208 = vadd.xlane.f32.xlu0 %v1207
        %v1209 = vpop.xlane.xlu0 %1208
        %v1210 = vrcp.pop 32.0
        %v1211 = vmul.f32 32.0, %v1210
        %v1212 = vsub.f32 1.0, %v1211
        %v1213 = vmul.f32 %v1210, %v1212
        %v1214 = vadd.f32 %v1210, %v1213
        %vm1215 = vweird.f32 %v1210
        %v1216 = vsel %vm1215, %v1210, %v1214
        %v1217 = vmul.f32 %v1188, %v1216
        %v1218 = vmul.f32 %v1191, %v1216
        %v1219 = vmul.f32 %v1194, %v1216
        %v1220 = vmul.f32 %v1197, %v1216
        %v1221 = vmul.f32 %v1200, %v1216
        %v1222 = vmul.f32 %v1203, %v1216
        %v1223 = vmul.f32 %v1206, %v1216
        %v1224 = vmul.f32 %v1209, %v1216
        %v1225 = vld [vmem:[%s10] sm:$0xff]
        %v1226 = vld [vmem:[%s10 + $0x8] sm:$0xff]
        %v1227 = vld [vmem:[%s10 + $0x10] sm:$0xff]
        %v1228 = vld [vmem:[%s10 + $0x18] sm:$0xff]
        %v1229 = vld [vmem:[%s10 + $0x20] sm:$0xff]
        %v1230 = vld [vmem:[%s10 + $0x28] sm:$0xff]
        %v1231 = vld [vmem:[%s10 + $0x30] sm:$0xff]
        %v1232 = vld [vmem:[%s10 + $0x38] sm:$0xff]
        %v1233 = vld [vmem:[%s10 + $0x40] sm:$0xff]
        %v1234 = vld [vmem:[%s10 + $0x48] sm:$0xff]
        %v1235 = vld [vmem:[%s10 + $0x50] sm:$0xff]
        %v1236 = vld [vmem:[%s10 + $0x58] sm:$0xff]
        %v1237 = vld [vmem:[%s10 + $0x60] sm:$0xff]
        %v1238 = vld [vmem:[%s10 + $0x68] sm:$0xff]
        %s1239 = sld [smem:[#allocation2]]
        %v1248 = vlaneseq
        %v1249 = vand.u32 %v1248, 127
        %v1250 = vperm.slane %v1164, %v1249
        %v1251 = vperm.slane %v1167, %v1249
        %v1252 = vperm.slane %v1170, %v1249
        %v1253 = vperm.slane %v1173, %v1249
        %v1254 = vperm.slane %v1176, %v1249
        %v1255 = vperm.slane %v1179, %v1249
        %v1256 = vperm.slane %v1182, %v1249
        %v1257 = vperm.slane %v1185, %v1249
        %vm1258 = vcmask 1044484
        %v1259 = vsel %vm1258, %v1251, %v1250
        %vm1260 = vcmask 1045509
        %v1261 = vsel %vm1260, %v1252, %v1259
        %vm1262 = vcmask 1046534
        %v1263 = vsel %vm1262, %v1253, %v1261
        %vm1264 = vcmask 1047559
        %v1265 = vsel %vm1264, %v1254, %v1263
        %vm1266 = vcmask 1041409
        %v1267 = vsel %vm1266, %v1256, %v1255
        %vm1268 = vcmask 1042434
        %v1269 = vsel %vm1268, %v1257, %v1267
        %vm1272 = vcmask 1042432
        %v1273 = vsel %vm1272, 0.0, %v1265
        %v1274 = vsel %vm1272, %v1269, 0.0
        %v1283 = vperm.slane %v1217, %v1249
        %v1284 = vperm.slane %v1218, %v1249
        %v1285 = vperm.slane %v1219, %v1249
        %v1286 = vperm.slane %v1220, %v1249
        %v1287 = vperm.slane %v1221, %v1249
        %v1288 = vperm.slane %v1222, %v1249
        %v1289 = vperm.slane %v1223, %v1249
        %v1290 = vperm.slane %v1224, %v1249
        %v1291 = vsel %vm1258, %v1284, %v1283
        %v1292 = vsel %vm1260, %v1285, %v1291
        %v1293 = vsel %vm1262, %v1286, %v1292
        %v1294 = vsel %vm1264, %v1287, %v1293
        %v1295 = vsel %vm1266, %v1289, %v1288
        %v1296 = vsel %vm1268, %v1290, %v1295
        %v1299 = vsel %vm1272, 0.0, %v1294
        %v1300 = vsel %vm1272, %v1296, 0.0
        %1302 = vrot.lane.b32.xlu0 %v1299, 8
        %v1303 = vpop.permute.xlu0 %1302
        %v1307 = vrot.slane %v1273, 1
        %v1308 = vrot.slane %v1274, 1
        %v1309 = vsel %vm650, %v1307, %v1308
        %1310 = vrot.lane.b32.xlu0 %v1309, 16
        %v1311 = vpop.permute.xlu0 %1310
        %v1314 = vrot.slane %v1299, 1
        %v1315 = vrot.slane %v1300, 1
        %v1316 = vsel %vm650, %v1314, %v1315
        %1317 = vrot.lane.b32.xlu0 %v1316, 24
        %v1318 = vpop.permute.xlu0 %1317
        %v1320 = vrot.slane %v1273, 2
        %v1321 = vrot.slane %v1274, 2
        %v1322 = vsel %vm675, %v1320, %v1321
        %1323 = vrot.lane.b32.xlu0 %v1322, 32
        %v1324 = vpop.permute.xlu0 %1323
        %v1326 = vrot.slane %v1299, 2
        %v1327 = vrot.slane %v1300, 2
        %v1328 = vsel %vm675, %v1326, %v1327
        %1329 = vrot.lane.b32.xlu0 %v1328, 40
        %v1330 = vpop.permute.xlu0 %1329
        %vm1332 = vcmask 1044480
        %v1333 = vrot.slane %v1273, 3
        %v1334 = vrot.slane %v1274, 3
        %v1335 = vsel %vm1332, %v1333, %v1334
        %1336 = vrot.lane.b32.xlu0 %v1335, 48
        %v1337 = vpop.permute.xlu0 %1336
        %v1339 = vrot.slane %v1299, 3
        %v1340 = vrot.slane %v1300, 3
        %v1341 = vsel %vm1332, %v1339, %v1340
        %1342 = vrot.lane.b32.xlu0 %v1341, 56
        %v1343 = vpop.permute.xlu0 %1342
        %v1345 = vrot.slane %v1273, 4
        %v1346 = vrot.slane %v1274, 4
        %v1347 = vsel %vm1024, %v1345, %v1346
        %1348 = vrot.lane.b32.xlu0 %v1347, 64
        %v1349 = vpop.permute.xlu0 %1348
        %v1351 = vrot.slane %v1299, 4
        %v1352 = vrot.slane %v1300, 4
        %v1353 = vsel %vm1024, %v1351, %v1352
        %1354 = vrot.lane.b32.xlu0 %v1353, 72
        %v1355 = vpop.permute.xlu0 %1354
        %v1357 = vrot.slane %v1273, 5
        %v1358 = vrot.slane %v1274, 5
        %v1359 = vsel %vm1272, %v1357, %v1358
        %1360 = vrot.lane.b32.xlu0 %v1359, 80
        %v1361 = vpop.permute.xlu0 %1360
        %v1363 = vrot.slane %v1299, 5
        %v1364 = vrot.slane %v1300, 5
        %v1365 = vsel %vm1272, %v1363, %v1364
        %1366 = vrot.lane.b32.xlu0 %v1365, 88
        %v1367 = vpop.permute.xlu0 %1366
        %vm1369 = vcmask 1041408
        %v1370 = vrot.slane %v1273, 6
        %v1371 = vrot.slane %v1274, 6
        %v1372 = vsel %vm1369, %v1370, %v1371
        %1373 = vrot.lane.b32.xlu0 %v1372, 96
        %v1374 = vpop.permute.xlu0 %1373
        %v1376 = vrot.slane %v1299, 6
        %v1377 = vrot.slane %v1300, 6
        %v1378 = vsel %vm1369, %v1376, %v1377
        %1379 = vrot.lane.b32.xlu0 %v1378, 104
        %v1380 = vpop.permute.xlu0 %1379
        %v1382 = vsel %vm900, %v1273, %v1303
        %v1383 = vsel %vm909, %v1382, %v1311
        %v1384 = vsel %vm918, %v1383, %v1318
        %v1385 = vsel %vm514, %v1384, %v1324
        %v1386 = vsel %vm935, %v1385, %v1330
        %v1387 = vsel %vm944, %v1386, %v1337
        %v1388 = vsel %vm953, %v1387, %v1343
        %v1389 = vsel %vm962, %v1388, %v1349
        %v1390 = vsel %vm1011, %v1389, %v1355
        %vm1391 = vcmask 654336
        %v1392 = vsel %vm1391, %v1390, %v1361
        %vm1393 = vcmask 719872
        %v1394 = vsel %vm1393, %v1392, %v1367
        %vm1395 = vcmask 785408
        %v1396 = vsel %vm1395, %v1394, %v1374
        %vm1397 = vcmask 850944
        %v1398 = vsel %vm1397, %v1396, %v1380
        %v1399 = vstv %s1239
        %vm1400 = vcmask 916480
        %v1402 = vsel %vm1400, %v1398, 0
        %1404 = vmatpush.msra.mxu0 0.0
        %1405 = vmatpush.msra.mxu0 0.0
        %1406 = vmatpush.msra.mxu0 %v1238
        %1407 = vmatpush.msra.mxu0 %v1237
        %1408 = vmatpush.msra.mxu0 %v1236
        %1409 = vmatpush.msra.mxu0 %v1235
        %1410 = vmatpush.msra.mxu0 %v1234
        %1411 = vmatpush.msra.mxu0 %v1233
        %1412 = vmatpush.msra.mxu0 %v1232
        %1413 = vmatpush.msra.mxu0 %v1231
        %1414 = vmatpush.msra.mxu0 %v1230
        %1415 = vmatpush.msra.mxu0 %v1229
        %1416 = vmatpush.msra.mxu0 %v1228
        %1417 = vmatpush.msra.mxu0 %v1227
        %1418 = vmatpush.msra.mxu0 %v1226
        %1419 = vmatpush.msra.mxu0 %v1225
        %1420 = vmatmul.f32.gmra.mxu0 %v1402
        %v1421 = vpop.f32.mrf.mxu0
        %v1422 = vadd.f32 %v1399, %v1421
        %1423 = vdwg.mxu0
        %v1424 = vsub.f32 0.0, %v1422
        %v1425 = vmul.f32 %v1424, 1.442695
        %v1426 = vpow.pop %v1425
        %v1427 = vadd.f32 %v1426, 1.0
        %v1428 = vrcp.pop %v1427
        %v1429 = vmul.f32 %v1427, %v1428
        %v1430 = vsub.f32 1.0, %v1429
        %v1431 = vmul.f32 %v1428, %v1430
        %v1432 = vadd.f32 %v1428, %v1431
        %vm1433 = vweird.f32 %v1427
        %vm1434 = vweird.f32 %v1428
        %vm1435 = vmor %vm1433, %vm1434
        %v1436 = vsel %vm1435, %v1428, %v1432
        %v1437 = vand.u32 2147483647, %v1427
        %vm1438 = vcmp.eq.f32.partialorder %v1437, 8.507059e+37
        %v1439 = vand.u32 %v1427, 2147483648
        %v1440 = vor.u32 1.1754944e-38, %v1439
        %v1441 = vsel %vm1438, %v1440, %v1436
        %v1442 = vmul.f32 1.0, %v1441
        %v1443 = vmax.f32 %v1162, %v1174
        %v1444 = vmax.f32 %v1165, %v1177
        %v1445 = vmax.f32 %v1168, %v1180
        %v1446 = vmax.f32 %v1171, %v1183
        %v1447 = vmax.f32 %v1443, %v1444
        %v1448 = vmax.f32 %v1445, %v1446
        %v1449 = vmax.f32 %v1447, %v1448
        %v1450 = vadd.f32 %v1186, %v1189
        %v1451 = vadd.f32 %v1450, %v1192
        %v1452 = vadd.f32 %v1451, %v1195
        %v1453 = vadd.f32 %v1452, %v1198
        %v1454 = vadd.f32 %v1453, %v1201
        %v1455 = vadd.f32 %v1454, %v1204
        %v1456 = vadd.f32 %v1455, %v1207
        %v1457 = vrcp.pop 8.0
        %v1458 = vmul.f32 8.0, %v1457
        %v1459 = vsub.f32 1.0, %v1458
        %v1460 = vmul.f32 %v1457, %v1459
        %v1461 = vadd.f32 %v1457, %v1460
        %vm1462 = vweird.f32 %v1457
        %v1463 = vsel %vm1462, %v1457, %v1461
        %v1464 = vmul.f32 %v1456, %v1463
        %v1465 = vld [vmem:[%s11] sm:$0xff]
        %v1466 = vld [vmem:[%s11 + $0x8] sm:$0xff]
        %v1467 = vld [vmem:[%s11 + $0x10] sm:$0xff]
        %v1468 = vld [vmem:[%s11 + $0x18] sm:$0xff]
        %v1469 = vld [vmem:[%s11 + $0x20] sm:$0xff]
        %v1470 = vld [vmem:[%s11 + $0x28] sm:$0xff]
        %v1471 = vld [vmem:[%s11 + $0x30] sm:$0xff]
        %v1472 = vld [vmem:[%s11 + $0x38] sm:$0xff]
        %v1473 = vld [vmem:[%s11 + $0x40] sm:$0xff]
        %v1474 = vld [vmem:[%s11 + $0x48] sm:$0xff]
        %v1475 = vld [vmem:[%s11 + $0x50] sm:$0xff]
        %v1476 = vld [vmem:[%s11 + $0x58] sm:$0xff]
        %v1477 = vld [vmem:[%s11 + $0x60] sm:$0xff]
        %v1478 = vld [vmem:[%s11 + $0x68] sm:$0xff]
        %v1479 = vld [vmem:[%s11 + $0x70] sm:$0xff]
        %v1480 = vld [vmem:[%s11 + $0x78] sm:$0xff]
        %v1481 = vld [vmem:[%s11 + $0x80] sm:$0xff]
        %v1482 = vld [vmem:[%s11 + $0x88] sm:$0xff]
        %v1483 = vld [vmem:[%s11 + $0x90] sm:$0xff]
        %v1484 = vld [vmem:[%s11 + $0x98] sm:$0xff]
        %v1485 = vld [vmem:[%s11 + $0xa0] sm:$0xff]
        %v1486 = vld [vmem:[%s11 + $0xa8] sm:$0xff]
        %v1487 = vld [vmem:[%s11 + $0xb0] sm:$0xff]
        %v1488 = vld [vmem:[%s11 + $0xb8] sm:$0xff]
        %v1489 = vld [vmem:[%s11 + $0xc0] sm:$0xff]
        %v1490 = vld [vmem:[%s11 + $0xc8] sm:$0xff]
        %v1491 = vld [vmem:[%s11 + $0xd0] sm:$0xff]
        %v1492 = vld [vmem:[%s11 + $0xd8] sm:$0xff]
        %v1493 = vld [vmem:[%s11 + $0xe0] sm:$0xff]
        %v1494 = vld [vmem:[%s11 + $0xe8] sm:$0xff]
        %v1495 = vld [vmem:[%s11 + $0xf0] sm:$0xff]
        %v1496 = vld [vmem:[%s11 + $0xf8] sm:$0xff]
        %v1497 = vld [vmem:[%s11 + $0x100] sm:$0xff]
        %v1498 = vld [vmem:[%s11 + $0x108] sm:$0xff]
        %v1499 = vld [vmem:[%s11 + $0x110] sm:$0xff]
        %v1500 = vld [vmem:[%s11 + $0x118] sm:$0xff]
        %v1501 = vld [vmem:[%s11 + $0x120] sm:$0xff]
        %v1502 = vld [vmem:[%s11 + $0x128] sm:$0xff]
        %v1503 = vld [vmem:[%s11 + $0x130] sm:$0xff]
        %v1504 = vld [vmem:[%s11 + $0x138] sm:$0xff]
        %v1505 = vld [vmem:[%s11 + $0x140] sm:$0xff]
        %v1506 = vld [vmem:[%s11 + $0x148] sm:$0xff]
        %v1507 = vld [vmem:[%s11 + $0x150] sm:$0xff]
        %v1508 = vld [vmem:[%s11 + $0x158] sm:$0xff]
        %v1509 = vld [vmem:[%s11 + $0x160] sm:$0xff]
        %v1510 = vld [vmem:[%s11 + $0x168] sm:$0xff]
        %v1511 = vld [vmem:[%s11 + $0x170] sm:$0xff]
        %v1512 = vld [vmem:[%s11 + $0x178] sm:$0xff]
        %v1513 = vld [vmem:[%s11 + $0x180] sm:$0xff]
        %v1514 = vld [vmem:[%s11 + $0x188] sm:$0xff]
        %v1515 = vld [vmem:[%s11 + $0x190] sm:$0xff]
        %v1516 = vld [vmem:[%s11 + $0x198] sm:$0xff]
        %v1517 = vld [vmem:[%s11 + $0x1a0] sm:$0xff]
        %v1518 = vld [vmem:[%s11 + $0x1a8] sm:$0xff]
        %v1519 = vld [vmem:[%s11 + $0x1b0] sm:$0xff]
        %v1520 = vld [vmem:[%s11 + $0x1b8] sm:$0xff]
        %s1521 = sld [smem:[#allocation2 + $0x1]]
        %v1523 = vrot.slane %v1449, 5
        %v1525 = vsel %vm1272, 0.0, %v1523
        %v1526 = vsel %vm1272, %v1523, 0.0
        %v1528 = vrot.slane %v1464, 5
        %v1530 = vsel %vm1272, 0.0, %v1528
        %v1531 = vsel %vm1272, %v1528, 0.0
        %1533 = vrot.lane.b32.xlu0 %v1530, 32
        %v1534 = vpop.permute.xlu0 %1533
        %v1538 = vrot.slane %v1525, 1
        %v1539 = vrot.slane %v1526, 1
        %v1540 = vsel %vm650, %v1538, %v1539
        %1541 = vrot.lane.b32.xlu0 %v1540, 64
        %v1542 = vpop.permute.xlu0 %1541
        %v1545 = vrot.slane %v1530, 1
        %v1546 = vrot.slane %v1531, 1
        %v1547 = vsel %vm650, %v1545, %v1546
        %1548 = vrot.lane.b32.xlu0 %v1547, 96
        %v1549 = vpop.permute.xlu0 %1548
        %v1551 = vrot.slane %v1525, 2
        %v1552 = vrot.slane %v1526, 2
        %v1553 = vsel %vm675, %v1551, %v1552
        %v1555 = vrot.slane %v1530, 2
        %v1556 = vrot.slane %v1531, 2
        %v1557 = vsel %vm675, %v1555, %v1556
        %1558 = vrot.lane.b32.xlu0 %v1557, 32
        %v1559 = vpop.permute.xlu0 %1558
        %v1561 = vrot.slane %v1525, 3
        %v1562 = vrot.slane %v1526, 3
        %v1563 = vsel %vm1332, %v1561, %v1562
        %1564 = vrot.lane.b32.xlu0 %v1563, 64
        %v1565 = vpop.permute.xlu0 %1564
        %v1567 = vrot.slane %v1530, 3
        %v1568 = vrot.slane %v1531, 3
        %v1569 = vsel %vm1332, %v1567, %v1568
        %1570 = vrot.lane.b32.xlu0 %v1569, 96
        %v1571 = vpop.permute.xlu0 %1570
        %v1573 = vrot.slane %v1525, 4
        %v1574 = vrot.slane %v1526, 4
        %v1575 = vsel %vm1024, %v1573, %v1574
        %v1577 = vrot.slane %v1530, 4
        %v1578 = vrot.slane %v1531, 4
        %v1579 = vsel %vm1024, %v1577, %v1578
        %1580 = vrot.lane.b32.xlu0 %v1579, 32
        %v1581 = vpop.permute.xlu0 %1580
        %v1583 = vrot.slane %v1525, 5
        %v1584 = vrot.slane %v1526, 5
        %v1585 = vsel %vm1272, %v1583, %v1584
        %1586 = vrot.lane.b32.xlu0 %v1585, 64
        %v1587 = vpop.permute.xlu0 %1586
        %v1589 = vrot.slane %v1530, 5
        %v1590 = vrot.slane %v1531, 5
        %v1591 = vsel %vm1272, %v1589, %v1590
        %1592 = vrot.lane.b32.xlu0 %v1591, 96
        %v1593 = vpop.permute.xlu0 %1592
        %v1595 = vrot.slane %v1525, 6
        %v1596 = vrot.slane %v1526, 6
        %v1597 = vsel %vm1369, %v1595, %v1596
        %v1599 = vrot.slane %v1530, 6
        %v1600 = vrot.slane %v1531, 6
        %v1601 = vsel %vm1369, %v1599, %v1600
        %1602 = vrot.lane.b32.xlu0 %v1601, 32
        %v1603 = vpop.permute.xlu0 %1602
        %v1605 = vsel %vm514, %v1525, %v1534
        %v1606 = vsel %vm962, %v1605, %v1542
        %v1607 = vsel %vm1395, %v1606, %v1549
        %v1608 = vsel %vm514, %v1553, %v1559
        %v1609 = vsel %vm962, %v1608, %v1565
        %v1610 = vsel %vm1395, %v1609, %v1571
        %v1611 = vsel %vm514, %v1575, %v1581
        %v1612 = vsel %vm962, %v1611, %v1587
        %v1613 = vsel %vm1395, %v1612, %v1593
        %v1614 = vsel %vm514, %v1597, %v1603
        %v1615 = vstv %s1521
        %v1617 = vsel %vm962, %v1614, 0
        %1619 = vmatpush.msra.mxu0 %v1480
        %1620 = vmatpush.msra.mxu0 %v1479
        %1621 = vmatpush.msra.mxu0 %v1478
        %1622 = vmatpush.msra.mxu0 %v1477
        %1623 = vmatpush.msra.mxu0 %v1476
        %1624 = vmatpush.msra.mxu0 %v1475
        %1625 = vmatpush.msra.mxu0 %v1474
        %1626 = vmatpush.msra.mxu0 %v1473
        %1627 = vmatpush.msra.mxu0 %v1472
        %1628 = vmatpush.msra.mxu0 %v1471
        %1629 = vmatpush.msra.mxu0 %v1470
        %1630 = vmatpush.msra.mxu0 %v1469
        %1631 = vmatpush.msra.mxu0 %v1468
        %1632 = vmatpush.msra.mxu0 %v1467
        %1633 = vmatpush.msra.mxu0 %v1466
        %1634 = vmatpush.msra.mxu0 %v1465
        %1635 = vmatmul.f32.gmra.mxu0 %v1607
        %v1636 = vpop.f32.mrf.mxu0
        %v1637 = vadd.f32 %v1615, %v1636
        %1638 = vdwg.mxu0
        %1639 = vmatpush.msra.mxu0 %v1496
        %1640 = vmatpush.msra.mxu0 %v1495
        %1641 = vmatpush.msra.mxu0 %v1494
        %1642 = vmatpush.msra.mxu0 %v1493
        %1643 = vmatpush.msra.mxu0 %v1492
        %1644 = vmatpush.msra.mxu0 %v1491
        %1645 = vmatpush.msra.mxu0 %v1490
        %1646 = vmatpush.msra.mxu0 %v1489
        %1647 = vmatpush.msra.mxu0 %v1488
        %1648 = vmatpush.msra.mxu0 %v1487
        %1649 = vmatpush.msra.mxu0 %v1486
        %1650 = vmatpush.msra.mxu0 %v1485
        %1651 = vmatpush.msra.mxu0 %v1484
        %1652 = vmatpush.msra.mxu0 %v1483
        %1653 = vmatpush.msra.mxu0 %v1482
        %1654 = vmatpush.msra.mxu0 %v1481
        %1655 = vmatmul.f32.gmra.mxu0 %v1610
        %v1656 = vpop.f32.mrf.mxu0
        %v1657 = vadd.f32 %v1637, %v1656
        %1658 = vdwg.mxu0
        %1659 = vmatpush.msra.mxu0 %v1512
        %1660 = vmatpush.msra.mxu0 %v1511
        %1661 = vmatpush.msra.mxu0 %v1510
        %1662 = vmatpush.msra.mxu0 %v1509
        %1663 = vmatpush.msra.mxu0 %v1508
        %1664 = vmatpush.msra.mxu0 %v1507
        %1665 = vmatpush.msra.mxu0 %v1506
        %1666 = vmatpush.msra.mxu0 %v1505
        %1667 = vmatpush.msra.mxu0 %v1504
        %1668 = vmatpush.msra.mxu0 %v1503
        %1669 = vmatpush.msra.mxu0 %v1502
        %1670 = vmatpush.msra.mxu0 %v1501
        %1671 = vmatpush.msra.mxu0 %v1500
        %1672 = vmatpush.msra.mxu0 %v1499
        %1673 = vmatpush.msra.mxu0 %v1498
        %1674 = vmatpush.msra.mxu0 %v1497
        %1675 = vmatmul.f32.gmra.mxu0 %v1613
        %v1676 = vpop.f32.mrf.mxu0
        %v1677 = vadd.f32 %v1657, %v1676
        %1678 = vdwg.mxu0
        %1679 = vmatpush.msra.mxu0 0.0
        %1680 = vmatpush.msra.mxu0 0.0
        %1681 = vmatpush.msra.mxu0 0.0
        %1682 = vmatpush.msra.mxu0 0.0
        %1683 = vmatpush.msra.mxu0 0.0
        %1684 = vmatpush.msra.mxu0 0.0
        %1685 = vmatpush.msra.mxu0 0.0
        %1686 = vmatpush.msra.mxu0 0.0
        %1687 = vmatpush.msra.mxu0 %v1520
        %1688 = vmatpush.msra.mxu0 %v1519
        %1689 = vmatpush.msra.mxu0 %v1518
        %1690 = vmatpush.msra.mxu0 %v1517
        %1691 = vmatpush.msra.mxu0 %v1516
        %1692 = vmatpush.msra.mxu0 %v1515
        %1693 = vmatpush.msra.mxu0 %v1514
        %1694 = vmatpush.msra.mxu0 %v1513
        %1695 = vmatmul.f32.gmra.mxu0 %v1617
        %v1696 = vpop.f32.mrf.mxu0
        %v1697 = vadd.f32 %v1677, %v1696
        %1698 = vdwg.mxu0
        %v1699 = vsub.f32 0.0, %v1697
        %v1700 = vmul.f32 %v1699, 1.442695
        %v1701 = vpow.pop %v1700
        %v1702 = vadd.f32 %v1701, 1.0
        %v1703 = vrcp.pop %v1702
        %v1704 = vmul.f32 %v1702, %v1703
        %v1705 = vsub.f32 1.0, %v1704
        %v1706 = vmul.f32 %v1703, %v1705
        %v1707 = vadd.f32 %v1703, %v1706
        %vm1708 = vweird.f32 %v1702
        %vm1709 = vweird.f32 %v1703
        %vm1710 = vmor %vm1708, %vm1709
        %v1711 = vsel %vm1710, %v1703, %v1707
        %v1712 = vand.u32 2147483647, %v1702
        %vm1713 = vcmp.eq.f32.partialorder %v1712, 8.507059e+37
        %v1714 = vand.u32 %v1702, 2147483648
        %v1715 = vor.u32 1.1754944e-38, %v1714
        %v1716 = vsel %vm1713, %v1715, %v1711
        %v1717 = vmul.f32 1.0, %v1716
        %v1718 = vrot.slane %v1162, 4
        %v1719 = vmax.f32 %v1162, %v1718
        %v1720 = vrot.slane %v1719, 2
        %v1721 = vmax.f32 %v1719, %v1720
        %v1722 = vrot.slane %v1721, 1
        %v1723 = vmax.f32 %v1721, %v1722
        %v1724 = vrot.slane %v1165, 4
        %v1725 = vmax.f32 %v1165, %v1724
        %v1726 = vrot.slane %v1725, 2
        %v1727 = vmax.f32 %v1725, %v1726
        %v1728 = vrot.slane %v1727, 1
        %v1729 = vmax.f32 %v1727, %v1728
        %v1730 = vrot.slane %v1168, 4
        %v1731 = vmax.f32 %v1168, %v1730
        %v1732 = vrot.slane %v1731, 2
        %v1733 = vmax.f32 %v1731, %v1732
        %v1734 = vrot.slane %v1733, 1
        %v1735 = vmax.f32 %v1733, %v1734
        %v1736 = vrot.slane %v1171, 4
        %v1737 = vmax.f32 %v1171, %v1736
        %v1738 = vrot.slane %v1737, 2
        %v1739 = vmax.f32 %v1737, %v1738
        %v1740 = vrot.slane %v1739, 1
        %v1741 = vmax.f32 %v1739, %v1740
        %v1742 = vrot.slane %v1174, 4
        %v1743 = vmax.f32 %v1174, %v1742
        %v1744 = vrot.slane %v1743, 2
        %v1745 = vmax.f32 %v1743, %v1744
        %v1746 = vrot.slane %v1745, 1
        %v1747 = vmax.f32 %v1745, %v1746
        %v1748 = vrot.slane %v1177, 4
        %v1749 = vmax.f32 %v1177, %v1748
        %v1750 = vrot.slane %v1749, 2
        %v1751 = vmax.f32 %v1749, %v1750
        %v1752 = vrot.slane %v1751, 1
        %v1753 = vmax.f32 %v1751, %v1752
        %v1754 = vrot.slane %v1180, 4
        %v1755 = vmax.f32 %v1180, %v1754
        %v1756 = vrot.slane %v1755, 2
        %v1757 = vmax.f32 %v1755, %v1756
        %v1758 = vrot.slane %v1757, 1
        %v1759 = vmax.f32 %v1757, %v1758
        %v1760 = vrot.slane %v1183, 4
        %v1761 = vmax.f32 %v1183, %v1760
        %v1762 = vrot.slane %v1761, 2
        %v1763 = vmax.f32 %v1761, %v1762
        %v1764 = vrot.slane %v1763, 1
        %v1765 = vmax.f32 %v1763, %v1764
        %v1766 = vrot.slane %v1186, 4
        %v1767 = vadd.f32 %v1186, %v1766
        %v1768 = vrot.slane %v1767, 2
        %v1769 = vadd.f32 %v1767, %v1768
        %v1770 = vrot.slane %v1769, 1
        %v1771 = vadd.f32 %v1769, %v1770
        %v1772 = vrot.slane %v1189, 4
        %v1773 = vadd.f32 %v1189, %v1772
        %v1774 = vrot.slane %v1773, 2
        %v1775 = vadd.f32 %v1773, %v1774
        %v1776 = vrot.slane %v1775, 1
        %v1777 = vadd.f32 %v1775, %v1776
        %v1778 = vrot.slane %v1192, 4
        %v1779 = vadd.f32 %v1192, %v1778
        %v1780 = vrot.slane %v1779, 2
        %v1781 = vadd.f32 %v1779, %v1780
        %v1782 = vrot.slane %v1781, 1
        %v1783 = vadd.f32 %v1781, %v1782
        %v1784 = vrot.slane %v1195, 4
        %v1785 = vadd.f32 %v1195, %v1784
        %v1786 = vrot.slane %v1785, 2
        %v1787 = vadd.f32 %v1785, %v1786
        %v1788 = vrot.slane %v1787, 1
        %v1789 = vadd.f32 %v1787, %v1788
        %v1790 = vrot.slane %v1198, 4
        %v1791 = vadd.f32 %v1198, %v1790
        %v1792 = vrot.slane %v1791, 2
        %v1793 = vadd.f32 %v1791, %v1792
        %v1794 = vrot.slane %v1793, 1
        %v1795 = vadd.f32 %v1793, %v1794
        %v1796 = vrot.slane %v1201, 4
        %v1797 = vadd.f32 %v1201, %v1796
        %v1798 = vrot.slane %v1797, 2
        %v1799 = vadd.f32 %v1797, %v1798
        %v1800 = vrot.slane %v1799, 1
        %v1801 = vadd.f32 %v1799, %v1800
        %v1802 = vrot.slane %v1204, 4
        %v1803 = vadd.f32 %v1204, %v1802
        %v1804 = vrot.slane %v1803, 2
        %v1805 = vadd.f32 %v1803, %v1804
        %v1806 = vrot.slane %v1805, 1
        %v1807 = vadd.f32 %v1805, %v1806
        %v1808 = vrot.slane %v1207, 4
        %v1809 = vadd.f32 %v1207, %v1808
        %v1810 = vrot.slane %v1809, 2
        %v1811 = vadd.f32 %v1809, %v1810
        %v1812 = vrot.slane %v1811, 1
        %v1813 = vadd.f32 %v1811, %v1812
        %v1814 = vmul.f32 %v1771, %v1463
        %v1815 = vmul.f32 %v1777, %v1463
        %v1816 = vmul.f32 %v1783, %v1463
        %v1817 = vmul.f32 %v1789, %v1463
        %v1818 = vmul.f32 %v1795, %v1463
        %v1819 = vmul.f32 %v1801, %v1463
        %v1820 = vmul.f32 %v1807, %v1463
        %v1821 = vmul.f32 %v1813, %v1463
        %v1822 = vld [vmem:[%s12] sm:$0xff]
        %v1823 = vld [vmem:[%s12 + $0x8] sm:$0xff]
        %v1824 = vld [vmem:[%s12 + $0x10] sm:$0xff]
        %v1825 = vld [vmem:[%s12 + $0x18] sm:$0xff]
        %v1826 = vld [vmem:[%s12 + $0x20] sm:$0xff]
        %v1827 = vld [vmem:[%s12 + $0x28] sm:$0xff]
        %v1828 = vld [vmem:[%s12 + $0x30] sm:$0xff]
        %v1829 = vld [vmem:[%s12 + $0x38] sm:$0xff]
        %v1830 = vld [vmem:[%s12 + $0x40] sm:$0xff]
        %v1831 = vld [vmem:[%s12 + $0x48] sm:$0xff]
        %v1832 = vld [vmem:[%s12 + $0x50] sm:$0xff]
        %v1833 = vld [vmem:[%s12 + $0x58] sm:$0xff]
        %v1834 = vld [vmem:[%s12 + $0x60] sm:$0xff]
        %v1835 = vld [vmem:[%s12 + $0x68] sm:$0xff]
        %v1836 = vld [vmem:[%s12 + $0x70] sm:$0xff]
        %v1837 = vld [vmem:[%s12 + $0x78] sm:$0xff]
        %v1838 = vld [vmem:[%s12 + $0x80] sm:$0xff]
        %v1839 = vld [vmem:[%s12 + $0x88] sm:$0xff]
        %v1840 = vld [vmem:[%s12 + $0x90] sm:$0xff]
        %v1841 = vld [vmem:[%s12 + $0x98] sm:$0xff]
        %v1842 = vld [vmem:[%s12 + $0xa0] sm:$0xff]
        %v1843 = vld [vmem:[%s12 + $0xa8] sm:$0xff]
        %v1844 = vld [vmem:[%s12 + $0xb0] sm:$0xff]
        %v1845 = vld [vmem:[%s12 + $0xb8] sm:$0xff]
        %v1846 = vld [vmem:[%s12 + $0xc0] sm:$0xff]
        %v1847 = vld [vmem:[%s12 + $0xc8] sm:$0xff]
        %v1848 = vld [vmem:[%s12 + $0xd0] sm:$0xff]
        %v1849 = vld [vmem:[%s12 + $0xd8] sm:$0xff]
        %v1850 = vld [vmem:[%s12 + $0xe0] sm:$0xff]
        %v1851 = vld [vmem:[%s12 + $0xe8] sm:$0xff]
        %v1852 = vld [vmem:[%s12 + $0xf0] sm:$0xff]
        %v1853 = vld [vmem:[%s12 + $0xf8] sm:$0xff]
        %v1854 = vld [vmem:[%s12 + $0x100] sm:$0xff]
        %v1855 = vld [vmem:[%s12 + $0x108] sm:$0xff]
        %v1856 = vld [vmem:[%s12 + $0x110] sm:$0xff]
        %v1857 = vld [vmem:[%s12 + $0x118] sm:$0xff]
        %v1858 = vld [vmem:[%s12 + $0x120] sm:$0xff]
        %v1859 = vld [vmem:[%s12 + $0x128] sm:$0xff]
        %v1860 = vld [vmem:[%s12 + $0x130] sm:$0xff]
        %v1861 = vld [vmem:[%s12 + $0x138] sm:$0xff]
        %v1862 = vld [vmem:[%s12 + $0x140] sm:$0xff]
        %v1863 = vld [vmem:[%s12 + $0x148] sm:$0xff]
        %v1864 = vld [vmem:[%s12 + $0x150] sm:$0xff]
        %v1865 = vld [vmem:[%s12 + $0x158] sm:$0xff]
        %v1866 = vld [vmem:[%s12 + $0x160] sm:$0xff]
        %v1867 = vld [vmem:[%s12 + $0x168] sm:$0xff]
        %v1868 = vld [vmem:[%s12 + $0x170] sm:$0xff]
        %v1869 = vld [vmem:[%s12 + $0x178] sm:$0xff]
        %v1870 = vld [vmem:[%s12 + $0x180] sm:$0xff]
        %v1871 = vld [vmem:[%s12 + $0x188] sm:$0xff]
        %v1872 = vld [vmem:[%s12 + $0x190] sm:$0xff]
        %v1873 = vld [vmem:[%s12 + $0x198] sm:$0xff]
        %v1874 = vld [vmem:[%s12 + $0x1a0] sm:$0xff]
        %v1875 = vld [vmem:[%s12 + $0x1a8] sm:$0xff]
        %v1876 = vld [vmem:[%s12 + $0x1b0] sm:$0xff]
        %v1877 = vld [vmem:[%s12 + $0x1b8] sm:$0xff]
        %s1878 = sld [smem:[#allocation2 + $0x2]]
        %v1887 = vsel %vm1258, %v1729, %v1723
        %v1888 = vsel %vm1260, %v1735, %v1887
        %v1889 = vsel %vm1262, %v1741, %v1888
        %v1890 = vsel %vm1264, %v1747, %v1889
        %v1891 = vsel %vm1266, %v1759, %v1753
        %v1892 = vsel %vm1268, %v1765, %v1891
        %v1895 = vsel %vm1272, 0.0, %v1890
        %v1896 = vsel %vm1272, %v1892, 0.0
        %v1905 = vsel %vm1258, %v1815, %v1814
        %v1906 = vsel %vm1260, %v1816, %v1905
        %v1907 = vsel %vm1262, %v1817, %v1906
        %v1908 = vsel %vm1264, %v1818, %v1907
        %v1909 = vsel %vm1266, %v1820, %v1819
        %v1910 = vsel %vm1268, %v1821, %v1909
        %v1913 = vsel %vm1272, 0.0, %v1908
        %v1914 = vsel %vm1272, %v1910, 0.0
        %1916 = vrot.lane.b32.xlu0 %v1913, 32
        %v1917 = vpop.permute.xlu0 %1916
        %v1921 = vrot.slane %v1895, 1
        %v1922 = vrot.slane %v1896, 1
        %v1923 = vsel %vm650, %v1921, %v1922
        %1924 = vrot.lane.b32.xlu0 %v1923, 64
        %v1925 = vpop.permute.xlu0 %1924
        %v1928 = vrot.slane %v1913, 1
        %v1929 = vrot.slane %v1914, 1
        %v1930 = vsel %vm650, %v1928, %v1929
        %1931 = vrot.lane.b32.xlu0 %v1930, 96
        %v1932 = vpop.permute.xlu0 %1931
        %v1934 = vrot.slane %v1895, 2
        %v1935 = vrot.slane %v1896, 2
        %v1936 = vsel %vm675, %v1934, %v1935
        %v1938 = vrot.slane %v1913, 2
        %v1939 = vrot.slane %v1914, 2
        %v1940 = vsel %vm675, %v1938, %v1939
        %1941 = vrot.lane.b32.xlu0 %v1940, 32
        %v1942 = vpop.permute.xlu0 %1941
        %v1944 = vrot.slane %v1895, 3
        %v1945 = vrot.slane %v1896, 3
        %v1946 = vsel %vm1332, %v1944, %v1945
        %1947 = vrot.lane.b32.xlu0 %v1946, 64
        %v1948 = vpop.permute.xlu0 %1947
        %v1950 = vrot.slane %v1913, 3
        %v1951 = vrot.slane %v1914, 3
        %v1952 = vsel %vm1332, %v1950, %v1951
        %1953 = vrot.lane.b32.xlu0 %v1952, 96
        %v1954 = vpop.permute.xlu0 %1953
        %v1956 = vrot.slane %v1895, 4
        %v1957 = vrot.slane %v1896, 4
        %v1958 = vsel %vm1024, %v1956, %v1957
        %v1960 = vrot.slane %v1913, 4
        %v1961 = vrot.slane %v1914, 4
        %v1962 = vsel %vm1024, %v1960, %v1961
        %1963 = vrot.lane.b32.xlu0 %v1962, 32
        %v1964 = vpop.permute.xlu0 %1963
        %v1966 = vrot.slane %v1895, 5
        %v1967 = vrot.slane %v1896, 5
        %v1968 = vsel %vm1272, %v1966, %v1967
        %1969 = vrot.lane.b32.xlu0 %v1968, 64
        %v1970 = vpop.permute.xlu0 %1969
        %v1972 = vrot.slane %v1913, 5
        %v1973 = vrot.slane %v1914, 5
        %v1974 = vsel %vm1272, %v1972, %v1973
        %1975 = vrot.lane.b32.xlu0 %v1974, 96
        %v1976 = vpop.permute.xlu0 %1975
        %v1978 = vrot.slane %v1895, 6
        %v1979 = vrot.slane %v1896, 6
        %v1980 = vsel %vm1369, %v1978, %v1979
        %v1982 = vrot.slane %v1913, 6
        %v1983 = vrot.slane %v1914, 6
        %v1984 = vsel %vm1369, %v1982, %v1983
        %1985 = vrot.lane.b32.xlu0 %v1984, 32
        %v1986 = vpop.permute.xlu0 %1985
        %v1988 = vsel %vm514, %v1895, %v1917
        %v1989 = vsel %vm962, %v1988, %v1925
        %v1990 = vsel %vm1395, %v1989, %v1932
        %v1991 = vsel %vm514, %v1936, %v1942
        %v1992 = vsel %vm962, %v1991, %v1948
        %v1993 = vsel %vm1395, %v1992, %v1954
        %v1994 = vsel %vm514, %v1958, %v1964
        %v1995 = vsel %vm962, %v1994, %v1970
        %v1996 = vsel %vm1395, %v1995, %v1976
        %v1997 = vsel %vm514, %v1980, %v1986
        %v1998 = vstv %s1878
        %v2000 = vsel %vm962, %v1997, 0
        %2002 = vmatpush.msra.mxu0 %v1837
        %2003 = vmatpush.msra.mxu0 %v1836
        %2004 = vmatpush.msra.mxu0 %v1835
        %2005 = vmatpush.msra.mxu0 %v1834
        %2006 = vmatpush.msra.mxu0 %v1833
        %2007 = vmatpush.msra.mxu0 %v1832
        %2008 = vmatpush.msra.mxu0 %v1831
        %2009 = vmatpush.msra.mxu0 %v1830
        %2010 = vmatpush.msra.mxu0 %v1829
        %2011 = vmatpush.msra.mxu0 %v1828
        %2012 = vmatpush.msra.mxu0 %v1827
        %2013 = vmatpush.msra.mxu0 %v1826
        %2014 = vmatpush.msra.mxu0 %v1825
        %2015 = vmatpush.msra.mxu0 %v1824
        %2016 = vmatpush.msra.mxu0 %v1823
        %2017 = vmatpush.msra.mxu0 %v1822
        %2018 = vmatmul.f32.gmra.mxu0 %v1990
        %v2019 = vpop.f32.mrf.mxu0
        %v2020 = vadd.f32 %v1998, %v2019
        %2021 = vdwg.mxu0
        %2022 = vmatpush.msra.mxu0 %v1853
        %2023 = vmatpush.msra.mxu0 %v1852
        %2024 = vmatpush.msra.mxu0 %v1851
        %2025 = vmatpush.msra.mxu0 %v1850
        %2026 = vmatpush.msra.mxu0 %v1849
        %2027 = vmatpush.msra.mxu0 %v1848
        %2028 = vmatpush.msra.mxu0 %v1847
        %2029 = vmatpush.msra.mxu0 %v1846
        %2030 = vmatpush.msra.mxu0 %v1845
        %2031 = vmatpush.msra.mxu0 %v1844
        %2032 = vmatpush.msra.mxu0 %v1843
        %2033 = vmatpush.msra.mxu0 %v1842
        %2034 = vmatpush.msra.mxu0 %v1841
        %2035 = vmatpush.msra.mxu0 %v1840
        %2036 = vmatpush.msra.mxu0 %v1839
        %2037 = vmatpush.msra.mxu0 %v1838
        %2038 = vmatmul.f32.gmra.mxu0 %v1993
        %v2039 = vpop.f32.mrf.mxu0
        %v2040 = vadd.f32 %v2020, %v2039
        %2041 = vdwg.mxu0
        %2042 = vmatpush.msra.mxu0 %v1869
        %2043 = vmatpush.msra.mxu0 %v1868
        %2044 = vmatpush.msra.mxu0 %v1867
        %2045 = vmatpush.msra.mxu0 %v1866
        %2046 = vmatpush.msra.mxu0 %v1865
        %2047 = vmatpush.msra.mxu0 %v1864
        %2048 = vmatpush.msra.mxu0 %v1863
        %2049 = vmatpush.msra.mxu0 %v1862
        %2050 = vmatpush.msra.mxu0 %v1861
        %2051 = vmatpush.msra.mxu0 %v1860
        %2052 = vmatpush.msra.mxu0 %v1859
        %2053 = vmatpush.msra.mxu0 %v1858
        %2054 = vmatpush.msra.mxu0 %v1857
        %2055 = vmatpush.msra.mxu0 %v1856
        %2056 = vmatpush.msra.mxu0 %v1855
        %2057 = vmatpush.msra.mxu0 %v1854
        %2058 = vmatmul.f32.gmra.mxu0 %v1996
        %v2059 = vpop.f32.mrf.mxu0
        %v2060 = vadd.f32 %v2040, %v2059
        %2061 = vdwg.mxu0
        %2062 = vmatpush.msra.mxu0 0.0
        %2063 = vmatpush.msra.mxu0 0.0
        %2064 = vmatpush.msra.mxu0 0.0
        %2065 = vmatpush.msra.mxu0 0.0
        %2066 = vmatpush.msra.mxu0 0.0
        %2067 = vmatpush.msra.mxu0 0.0
        %2068 = vmatpush.msra.mxu0 0.0
        %2069 = vmatpush.msra.mxu0 0.0
        %2070 = vmatpush.msra.mxu0 %v1877
        %2071 = vmatpush.msra.mxu0 %v1876
        %2072 = vmatpush.msra.mxu0 %v1875
        %2073 = vmatpush.msra.mxu0 %v1874
        %2074 = vmatpush.msra.mxu0 %v1873
        %2075 = vmatpush.msra.mxu0 %v1872
        %2076 = vmatpush.msra.mxu0 %v1871
        %2077 = vmatpush.msra.mxu0 %v1870
        %2078 = vmatmul.f32.gmra.mxu0 %v2000
        %v2079 = vpop.f32.mrf.mxu0
        %v2080 = vadd.f32 %v2060, %v2079
        %2081 = vdwg.mxu0
        %v2082 = vsub.f32 0.0, %v2080
        %v2083 = vmul.f32 %v2082, 1.442695
        %v2084 = vpow.pop %v2083
        %v2085 = vadd.f32 %v2084, 1.0
        %v2086 = vrcp.pop %v2085
        %v2087 = vmul.f32 %v2085, %v2086
        %v2088 = vsub.f32 1.0, %v2087
        %v2089 = vmul.f32 %v2086, %v2088
        %v2090 = vadd.f32 %v2086, %v2089
        %vm2091 = vweird.f32 %v2085
        %vm2092 = vweird.f32 %v2086
        %vm2093 = vmor %vm2091, %vm2092
        %v2094 = vsel %vm2093, %v2086, %v2090
        %v2095 = vand.u32 2147483647, %v2085
        %vm2096 = vcmp.eq.f32.partialorder %v2095, 8.507059e+37
        %v2097 = vand.u32 %v2085, 2147483648
        %v2098 = vor.u32 1.1754944e-38, %v2097
        %v2099 = vsel %vm2096, %v2098, %v2094
        %v2100 = vmul.f32 1.0, %v2099
        %v2101 = vperm.slane %v1442, 0
        %v2102 = vlaneseq
        %v2103 = vshrl.u32 %v2102, 7
        %2105 = vset.pattern.permute.xlu0 %v2103
        %2106 = vperm.xlu0 %2105, %v2101
        %v2107 = vpop.permute.xlu0 %2106
        %v2108 = vperm.slane %v1442, 1
        %v2109 = vlaneseq
        %v2110 = vshrl.u32 %v2109, 7
        %2112 = vset.pattern.permute.xlu0 %v2110
        %2113 = vperm.xlu0 %2112, %v2108
        %v2114 = vpop.permute.xlu0 %2113
        %v2115 = vperm.slane %v1442, 2
        %v2116 = vlaneseq
        %v2117 = vshrl.u32 %v2116, 7
        %2119 = vset.pattern.permute.xlu0 %v2117
        %2120 = vperm.xlu0 %2119, %v2115
        %v2121 = vpop.permute.xlu0 %2120
        %v2122 = vperm.slane %v1442, 3
        %v2123 = vlaneseq
        %v2124 = vshrl.u32 %v2123, 7
        %2126 = vset.pattern.permute.xlu0 %v2124
        %2127 = vperm.xlu0 %2126, %v2122
        %v2128 = vpop.permute.xlu0 %2127
        %v2129 = vperm.slane %v1442, 4
        %v2130 = vlaneseq
        %v2131 = vshrl.u32 %v2130, 7
        %2133 = vset.pattern.permute.xlu0 %v2131
        %2134 = vperm.xlu0 %2133, %v2129
        %v2135 = vpop.permute.xlu0 %2134
        %v2136 = vperm.slane %v1442, 5
        %v2137 = vlaneseq
        %v2138 = vshrl.u32 %v2137, 7
        %2140 = vset.pattern.permute.xlu0 %v2138
        %2141 = vperm.xlu0 %2140, %v2136
        %v2142 = vpop.permute.xlu0 %2141
        %v2143 = vperm.slane %v1442, 6
        %v2144 = vlaneseq
        %v2145 = vshrl.u32 %v2144, 7
        %2147 = vset.pattern.permute.xlu0 %v2145
        %2148 = vperm.xlu0 %2147, %v2143
        %v2149 = vpop.permute.xlu0 %2148
        %v2150 = vperm.slane %v1442, 7
        %v2151 = vlaneseq
        %v2152 = vshrl.u32 %v2151, 7
        %2154 = vset.pattern.permute.xlu0 %v2152
        %2155 = vperm.xlu0 %2154, %v2150
        %v2156 = vpop.permute.xlu0 %2155
        %v2157 = vmul.f32 %v1154, %v2107
        %v2158 = vmul.f32 %v1155, %v2114
        %v2159 = vmul.f32 %v1156, %v2121
        %v2160 = vmul.f32 %v1157, %v2128
        %v2161 = vmul.f32 %v1158, %v2135
        %v2162 = vmul.f32 %v1159, %v2142
        %v2163 = vmul.f32 %v1160, %v2149
        %v2164 = vmul.f32 %v1161, %v2156
        %v2165 = vmul.f32 %v1154, %v1717
        %v2166 = vmul.f32 %v1155, %v1717
        %v2167 = vmul.f32 %v1156, %v1717
        %v2168 = vmul.f32 %v1157, %v1717
        %v2169 = vmul.f32 %v1158, %v1717
        %v2170 = vmul.f32 %v1159, %v1717
        %v2171 = vmul.f32 %v1160, %v1717
        %v2172 = vmul.f32 %v1161, %v1717
        %v2173 = vadd.f32 %v2157, %v2165
        %v2174 = vadd.f32 %v2158, %v2166
        %v2175 = vadd.f32 %v2159, %v2167
        %v2176 = vadd.f32 %v2160, %v2168
        %v2177 = vadd.f32 %v2161, %v2169
        %v2178 = vadd.f32 %v2162, %v2170
        %v2179 = vadd.f32 %v2163, %v2171
        %v2180 = vadd.f32 %v2164, %v2172
        %v2182 = vrot.slane %v2100, 1
        %v2183 = vrot.slane %v2100, 2
        %v2184 = vrot.slane %v2100, 3
        %v2185 = vrot.slane %v2100, 4
        %v2186 = vrot.slane %v2100, 5
        %v2187 = vrot.slane %v2100, 6
        %v2188 = vrot.slane %v2100, 7
        %v2189 = vperm.slane %v2100, 0
        %v2190 = vperm.slane %v2182, 0
        %v2191 = vperm.slane %v2183, 0
        %v2192 = vperm.slane %v2184, 0
        %v2193 = vperm.slane %v2185, 0
        %v2194 = vperm.slane %v2186, 0
        %v2195 = vperm.slane %v2187, 0
        %v2196 = vperm.slane %v2188, 0
        %v2205 = vmul.f32 %v1154, %v2189
        %v2206 = vmul.f32 %v1155, %v2190
        %v2207 = vmul.f32 %v1156, %v2191
        %v2208 = vmul.f32 %v1157, %v2192
        %v2209 = vmul.f32 %v1158, %v2193
        %v2210 = vmul.f32 %v1159, %v2194
        %v2211 = vmul.f32 %v1160, %v2195
        %v2212 = vmul.f32 %v1161, %v2196
        %v2213 = vadd.f32 %v2173, %v2205
        %v2214 = vadd.f32 %v2174, %v2206
        %v2215 = vadd.f32 %v2175, %v2207
        %v2216 = vadd.f32 %v2176, %v2208
        %v2217 = vadd.f32 %v2177, %v2209
        %v2218 = vadd.f32 %v2178, %v2210
        %v2219 = vadd.f32 %v2179, %v2211
        %v2220 = vadd.f32 %v2180, %v2212
        %v2221 = vmul.f32 %v2213, 0.33333334
        %v2222 = vmul.f32 %v2214, 0.33333334
        %v2223 = vmul.f32 %v2215, 0.33333334
        %v2224 = vmul.f32 %v2216, 0.33333334
        %v2225 = vmul.f32 %v2217, 0.33333334
        %v2226 = vmul.f32 %v2218, 0.33333334
        %v2227 = vmul.f32 %v2219, 0.33333334
        %v2228 = vmul.f32 %v2220, 0.33333334
        %v2229 = vadd.f32 %v2221, %v486
        %v2230 = vadd.f32 %v2222, %v487
        %v2231 = vadd.f32 %v2223, %v488
        %v2232 = vadd.f32 %v2224, %v489
        %v2233 = vadd.f32 %v2225, %v490
        %v2234 = vadd.f32 %v2226, %v491
        %v2235 = vadd.f32 %v2227, %v492
        %v2236 = vadd.f32 %v2228, %v493
        %v2237 = vmax.f32 %v2229, 0.0
        %v2238 = vmax.f32 %v2230, 0.0
        %v2239 = vmax.f32 %v2231, 0.0
        %v2240 = vmax.f32 %v2232, 0.0
        %v2241 = vmax.f32 %v2233, 0.0
        %v2242 = vmax.f32 %v2234, 0.0
        %v2243 = vmax.f32 %v2235, 0.0
        %v2244 = vmax.f32 %v2236, 0.0
        %2245 = vst.msk [vmem:[%s483] sm:$0xff] %vm514, %v2237
        %2246 = vst.msk [vmem:[%s483 + $0x8] sm:$0xff] %vm514, %v2238
        %2247 = vst.msk [vmem:[%s483 + $0x10] sm:$0xff] %vm514, %v2239
        %2248 = vst.msk [vmem:[%s483 + $0x18] sm:$0xff] %vm514, %v2240
        %2249 = vst.msk [vmem:[%s483 + $0x20] sm:$0xff] %vm514, %v2241
        %2250 = vst.msk [vmem:[%s483 + $0x28] sm:$0xff] %vm514, %v2242
        %2251 = vst.msk [vmem:[%s483 + $0x30] sm:$0xff] %vm514, %v2243
        %2252 = vst.msk [vmem:[%s483 + $0x38] sm:$0xff] %vm514, %v2244
        %s2253 = smul.u32 8, %s26
        %p2254 = scmp.lt.s32.totalorder %s2253, 15
        %s2255 = scalar_select %p2254, %s2253, 15
        %s2256 = smul.addr %s2255, 8
        %s2257 = scalar_lea.vmem %s14, %s2256
        // Predicated region
        $region81: #{tpu_custom_call.1} parent=75 // pred_check
          %p2258 = pneg %p343
        $region82: #{tpu_custom_call.1} parent=75 // pred_check_branch
          %2260 = sbr.rel (%p2258) target = $region84
        $region83: #{tpu_custom_call.1} parent=75 // pred_region
          %s2261 = smul.u32 8, %s26
        $region84: #{tpu_custom_call.1} parent=75 // pred_fallthru
          _
      $region76: #{tpu_custom_call.1} parent=5 // pred_fallthru
        _
      %p2262 = scmp.le.s32.totalorder 2, %s21
      // Predicated region
      $region85: #{tpu_custom_call.1} parent=5 // pred_check
        %p2263 = pneg %p2262
      $region86: #{tpu_custom_call.1} parent=5 // pred_check_branch
        %2265 = sbr.rel (%p2263) target = $region88
      $region87: #{tpu_custom_call.1} parent=5 // pred_region
        %s2266 = ssub.s32 %s21, 2
        // Predicated region
        $region89: #{tpu_custom_call.1} parent=87 // pred_check
          %p2267 = pneg %p349
        $region90: #{tpu_custom_call.1} parent=87 // pred_check_branch
          %2269 = sbr.rel (%p2267) target = $region92
        $region91: #{tpu_custom_call.1} parent=87 // pred_region
          %s2270 = smul.u32 8, %s27
          %p2271 = scmp.lt.s32.totalorder %s2270, 15
          %s2272 = scalar_select %p2271, %s2270, 15
          %s2273 = smul.addr %s2272, 8
          %s2274 = scalar_lea.vmem %s14, %s2273
        $region92: #{tpu_custom_call.1} parent=87 // pred_fallthru
          _
      $region88: #{tpu_custom_call.1} parent=5 // pred_fallthru
        _
    $region6: #{tpu_custom_call.1} parent=1 // loop_footer
      %s25 = sadd.s32 1, %s21
    $region7: #{tpu_custom_call.1} parent=1 // loop_footer_branch
      %20 = sbr.rel target = $region3
    $region8: #{tpu_custom_call.1} parent=1 // loop_exit
      _
    %2275 = vsyncpa [#allocation3], 1
    %s2276 = scalar_lea.sflag [#allocation3], 1
    %2277 = vsyncpa %s2276, 1

</llo_original>
